<compile_context>
chip_gen: v7x
topology: tpu7x:2x2x1
jax: 0.10.0
libtpu: 0.0.40
codegen_flags: <defaults>
</compile_context>

<pallas_src>
import math

import numpy as np
import jax
import jax.numpy as jnp
from jax import lax
from jax.experimental import pallas as pl
from jax.experimental.pallas import tpu as pltpu

# ---- problem sizes (small, consistent with mLSTMLayerConfig defaults) ----
B, S, E = 2, 8, 32
PROJ_FACTOR = 2.0
ID = int(round(PROJ_FACTOR * E))        # inner embedding dim (64)
NH = 4                                  # mLSTM cell heads
DH = ID // NH                           # head dim (16)
QKV_BLOCK = 4                           # qkv_proj_blocksize
NPROJ = ID // QKV_BLOCK                 # headwise-projection heads (16)
KCONV = 4                               # causal conv1d kernel size
LN_EPS = 1e-5
GN_EPS = 1e-5
CELL_EPS = 1e-6
NEG_INF = -1e30
ST = B * S                              # stacked rows (batch folded onto sublanes) = 16
INV_SQRT_DH = 1.0 / math.sqrt(DH)
LANE = 128                              # lane-aligned slab width


# ---------------------------------------------------------------------------
# Pallas kernel (single un-gridded invocation, everything resident in VMEM)
# ---------------------------------------------------------------------------
def _xlstm_block_kernel(x_ref, w_up_ref, w_qk_ref, w_gqk_ref, w_gv_ref, b_gate_ref,
                        w_down_ref, c64_ref, c16_ref, avg_ref, small_ref, out_ref):
    f32 = jnp.float32
    bf16 = jnp.bfloat16

    x = x_ref[...]                                   # (ST, E) f32

    # ---- small per-channel vectors (one packed row each) ----
    conv_b = small_ref[0:1, :]                       # (1, 128)
    outnorm_w = small_ref[1:2, :]                    # (1, 128)
    skip_w = small_ref[2:3, :]                       # (1, 128)
    ln_w = small_ref[3:4, 0:E]                       # (1, E)

    # ---- precomputed constant operators (hoisted out of the kernel) ----
    TILE4 = c64_ref[:, 0:ST]                         # (64,16) [r,j]=(r%ST==j); per-block identity
    CONVW = c64_ref[:, LANE:2 * LANE]                # (64,128) conv taps broadcast per shift block
    HEADSEL = c64_ref[:, 2 * LANE:2 * LANE + NH]     # (64,4)  [h*ST+i,h']=(h==h')
    NEGM = c64_ref[:, 3 * LANE:3 * LANE + ST]        # (64,16) additive causal mask (0 / -1e30)
    HLQ = c64_ref[:, 4 * LANE:5 * LANE]              # (64,128) head-lane mask * 1/sqrt(DH)
    HLV = c64_ref[:, 5 * LANE:6 * LANE]              # (64,128) head-lane mask
    SH = c16_ref[:, 0:KCONV * ST]                    # (16,64) causal conv shift matrix
    COLT = c16_ref[:, LANE:LANE + NH * ST]           # (16,64) head collapse: [i,h*ST+i']=(i==i')
    CUM_LO = c16_ref[:, 2 * LANE:2 * LANE + ST]      # (16,16) per-batch inclusive-cumsum operator
    AVG = avg_ref[...]                               # (128,128) per-head block averaging

    # ---- xlstm_norm: LayerNorm (residual weight 1 + w, no bias) ----
    mu = jnp.mean(x, axis=-1, keepdims=True)
    xc = x - mu
    var = jnp.mean(xc * xc, axis=-1, keepdims=True)
    xn = xc * lax.rsqrt(var + LN_EPS) * (1.0 + ln_w)

    # ---- fused up-projection: [x_mlstm | z | v], each in its own 128-lane slab ----
    xi = jnp.dot(xn.astype(bf16), w_up_ref[...], preferred_element_type=f32)     # (ST, 384)
    x_m = xi[:, 0:LANE]
    z = xi[:, LANE:2 * LANE]
    v = xi[:, 2 * LANE:3 * LANE]

    # ---- causal depthwise conv1d: weighted shift-stack + one shift-matrix matmul ----
    xw = jnp.dot(TILE4, x_m, preferred_element_type=f32) * CONVW                 # (64,128)
    conv = jnp.dot(SH, xw, preferred_element_type=f32) + conv_b                  # (ST,128)
    conv_act = conv * (1.0 / (1.0 + jnp.exp(-conv)))                             # SiLU

    # ---- q, k from one lane-dense matmul; v came from the up-projection ----
    qk = jnp.dot(conv_act.astype(bf16), w_qk_ref[...], preferred_element_type=f32)  # (ST,256)
    q = qk[:, 0:LANE]
    k = qk[:, LANE:2 * LANE]

    # ---- input/forget gate pre-activations, computed ONCE (f32, no lane concat) ----
    gates_t = (lax.dot_general(w_gqk_ref[...], qk, (((1,), (1,)), ((), ())),
                               preferred_element_type=f32)
               + lax.dot_general(w_gv_ref[...], xi, (((1,), (1,)), ((), ())),
                                 preferred_element_type=f32)
               + b_gate_ref[...])                                                # (2NH, ST)
    ig_t = gates_t[0:NH, :]                                                      # (NH, ST)
    fg_t = gates_t[NH:2 * NH, :]
    logf_t = jnp.minimum(fg_t, 0.0) - jnp.log(1.0 + jnp.exp(-jnp.abs(fg_t)))     # logsigmoid

    # per-batch inclusive cumsum of logsigmoid(f), all heads at once (single matmul)
    csum_t = lax.dot_general(logf_t, CUM_LO, (((1,), (1,)), ((), ())),
                             preferred_element_type=f32)                         # (NH, ST)
    g_t = ig_t - csum_t

    # ---- stabilized mLSTM decay core, all heads stacked on sublanes (64 x 16) ----
    term_key = jnp.dot(HEADSEL, g_t, preferred_element_type=f32)                 # [h*ST+i,j]=ig[j,h]-csum[j,h]
    csum_rows = jnp.dot(HEADSEL, csum_t, preferred_element_type=f32)             # [h*ST+i,j]=csum[j,h]
    term_query = jnp.sum(csum_rows * TILE4, axis=-1, keepdims=True)              # (64,1)  = csum[i,h]
    log_d = term_query + term_key + NEGM                                         # (64,16)
    m = jnp.max(log_d, axis=-1, keepdims=True)
    d = jnp.exp(log_d - m)

    q_rows = jnp.dot(TILE4, q, preferred_element_type=f32) * HLQ                 # (64,128) head-masked, scaled q
    scores = lax.dot_general(q_rows, k, (((1,), (1,)), ((), ())),
                             preferred_element_type=f32)                         # (64,16)
    c = scores * d
    normalizer = jnp.maximum(jnp.abs(jnp.sum(c, axis=-1, keepdims=True)), jnp.exp(-m))
    c_n = c * pl.reciprocal(normalizer + CELL_EPS, approx=True)

    hv = jnp.dot(c_n, v, preferred_element_type=f32) * HLV                       # (64,128)
    h_all = jnp.dot(COLT, hv, preferred_element_type=f32)                        # (ST,128)

    # ---- MultiHeadLayerNorm vectorized across heads (block-averaging matmul) ----
    mean = jnp.dot(h_all, AVG, preferred_element_type=f32)
    hc = h_all - mean
    hvar = jnp.dot(hc * hc, AVG, preferred_element_type=f32)
    h_norm = hc * lax.rsqrt(hvar + GN_EPS) * (1.0 + outnorm_w)

    # ---- learnable skip, output gate, down-projection, residual ----
    zs = z * (1.0 / (1.0 + jnp.exp(-z)))
    h_state = (h_norm + skip_w * conv_act) * zs
    y = jnp.dot(h_state.astype(bf16), w_down_ref[...], preferred_element_type=f32)  # (ST, E)
    out_ref[...] = x + y


# ---------------------------------------------------------------------------
# wrapper: single un-gridded pallas_call, whole-array VMEM operands
# ---------------------------------------------------------------------------
def xlstm_block_forward(x, packed):
    x2 = x.reshape(ST, E).astype(jnp.float32)
    operands = (x2,) + tuple(packed)
    vmem = pl.BlockSpec(memory_space=pltpu.MemorySpace.VMEM)
    out = pl.pallas_call(
        _xlstm_block_kernel,
        out_shape=jax.ShapeDtypeStruct((ST, E), jnp.float32),
        in_specs=[vmem] * len(operands),
        out_specs=vmem,
    )(*operands)
    return out.reshape(B, S, E)


# ---------------------------------------------------------------------------
# parameters: reference (unpacked) + packing for the kernel
# ---------------------------------------------------------------------------
def init_params(key):
    """Deterministic synthetic parameters (shapes follow mLSTMLayer/xLSTMBlock)."""
    ks = jax.random.split(key, 10)

    def nrm(k, shape, std):
        return (std * jax.random.normal(k, shape, dtype=jnp.float32)).astype(jnp.float32)

    def block_diag_proj(k):
        blocks = nrm(k, (NPROJ, QKV_BLOCK, QKV_BLOCK), math.sqrt(2.0 / (5.0 * QKV_BLOCK)))
        return jax.scipy.linalg.block_diag(
            *[blocks[h].T for h in range(NPROJ)]).astype(jnp.float32)

    p = {
        "ln_w": jnp.zeros((E,), jnp.float32),                 # residual weight (1 + w)
        "w_up": nrm(ks[0], (E, 2 * ID), math.sqrt(2.0 / (5.0 * E))),
        "conv_w": nrm(ks[1], (KCONV, ID), 0.1),
        "conv_b": nrm(ks[2], (ID,), 0.02),
        "w_q": block_diag_proj(ks[3]),                        # LinearHeadwiseExpand, bias=False
        "w_k": block_diag_proj(ks[4]),
        "w_v": block_diag_proj(ks[5]),
        "w_ig": nrm(ks[6], (3 * ID, NH), 0.02),
        "b_ig": (0.1 * jax.random.normal(ks[7], (NH,), dtype=jnp.float32)),
        "w_fg": nrm(ks[8], (3 * ID, NH), 0.02),
        "b_fg": jnp.linspace(3.0, 6.0, NH, dtype=jnp.float32),  # forget-gate bias init
        "outnorm_w": jnp.zeros((ID,), jnp.float32),
        "skip_w": jnp.ones((ID,), jnp.float32),
        "w_down": nrm(ks[9], (ID, E), 2.0 / math.sqrt(ID)),
    }
    return p


def pack_params(p):
    np_p = {k: np.asarray(v, dtype=np.float32) for k, v in p.items()}

    # --- big projection weights: lane-aligned 128-wide slabs, stored bf16 ---
    w_up_ext = np.zeros((E, 3 * LANE), np.float32)
    w_up_ext[:, 0:ID] = np_p["w_up"][:, :ID]                                  # x_mlstm slab
    w_up_ext[:, LANE:LANE + ID] = np_p["w_up"][:, ID:2 * ID]                  # z slab
    w_up_ext[:, 2 * LANE:2 * LANE + ID] = np_p["w_up"][:, :ID] @ np_p["w_v"]  # v slab (w_v folded)

    w_qk = np.zeros((LANE, 2 * LANE), np.float32)
    w_qk[0:ID, 0:ID] = np_p["w_q"]
    w_qk[0:ID, LANE:LANE + ID] = np_p["w_k"]

    w_down = np.zeros((LANE, E), np.float32)
    w_down[0:ID, :] = np_p["w_down"]

    # --- gate projections (stay f32; split so the kernel needs no lane concat) ---
    wg = np.concatenate([np_p["w_ig"], np_p["w_fg"]], axis=1)                 # (3*ID, 2*NH)
    w_gqk_t = np.zeros((2 * NH, 2 * LANE), np.float32)
    w_gqk_t[:, 0:ID] = wg[0:ID, :].T                                          # q part
    w_gqk_t[:, LANE:LANE + ID] = wg[ID:2 * ID, :].T                           # k part
    w_gv_t = np.zeros((2 * NH, 3 * LANE), np.float32)
    w_gv_t[:, 2 * LANE:2 * LANE + ID] = wg[2 * ID:3 * ID, :].T                # v part (vs. xi)
    b_gate = np.concatenate([np_p["b_ig"], np_p["b_fg"]]).reshape(2 * NH, 1)

    # --- constant operators (compile-time constants, hoisted out of the kernel) ---
    idx = np.arange(ST)
    same_batch = (idx[:, None] // S) == (idx[None, :] // S)
    causal = (idx[None, :] <= idx[:, None]) & same_batch                      # (ST,ST)
    cum_lo = causal.astype(np.float32)
    eye_st = np.eye(ST, dtype=np.float32)
    tile4 = np.concatenate([eye_st] * NH, axis=0)                             # (64,16)

    sh = np.zeros((ST, KCONV * ST), np.float32)                               # conv shift matrix
    for o in range(KCONV):
        for r in range(ST):
            src = r - o
            if src >= 0 and (src // S) == (r // S):
                sh[r, o * ST + src] = 1.0

    colt = np.zeros((ST, NH * ST), np.float32)
    headsel = np.zeros((NH * ST, NH), np.float32)
    hlv = np.zeros((NH * ST, LANE), np.float32)
    for h in range(NH):
        colt[:, h * ST:(h + 1) * ST] = eye_st
        headsel[h * ST:(h + 1) * ST, h] = 1.0
        hlv[h * ST:(h + 1) * ST, h * DH:(h + 1) * DH] = 1.0
    hlq = hlv * INV_SQRT_DH
    negm = np.tile(np.where(causal, 0.0, NEG_INF).astype(np.float32), (NH, 1))

    convw = np.zeros((NH * ST, LANE), np.float32)
    for o in range(KCONV):
        convw[o * ST:(o + 1) * ST, 0:ID] = np_p["conv_w"][KCONV - 1 - o][None, :]

    c64 = np.zeros((NH * ST, 6 * LANE), np.float32)
    c64[:, 0:ST] = tile4
    c64[:, LANE:2 * LANE] = convw
    c64[:, 2 * LANE:2 * LANE + NH] = headsel
    c64[:, 3 * LANE:3 * LANE + ST] = negm
    c64[:, 4 * LANE:5 * LANE] = hlq
    c64[:, 5 * LANE:6 * LANE] = hlv

    c16 = np.zeros((ST, 3 * LANE), np.float32)
    c16[:, 0:KCONV * ST] = sh
    c16[:, LANE:LANE + NH * ST] = colt
    c16[:, 2 * LANE:2 * LANE + ST] = cum_lo

    avg = np.zeros((LANE, LANE), np.float32)
    for h in range(NH):
        avg[h * DH:(h + 1) * DH, h * DH:(h + 1) * DH] = 1.0 / DH

    small = np.zeros((8, LANE), np.float32)
    small[0, 0:ID] = np_p["conv_b"]
    small[1, 0:ID] = np_p["outnorm_w"]
    small[2, 0:ID] = np_p["skip_w"]
    small[3, 0:E] = np_p["ln_w"]

    bf16, f32 = jnp.bfloat16, jnp.float32
    return (jnp.asarray(w_up_ext, bf16), jnp.asarray(w_qk, bf16),
            jnp.asarray(w_gqk_t, f32), jnp.asarray(w_gv_t, f32),
            jnp.asarray(b_gate, f32), jnp.asarray(w_down, bf16),
            jnp.asarray(c64, f32), jnp.asarray(c16, f32),
            jnp.asarray(avg, f32), jnp.asarray(small, f32))


# ---------------------------------------------------------------------------
# independent pure-JAX (f32) reference following the PyTorch module structure
# ---------------------------------------------------------------------------
def reference_forward(x, p):
    ln_w = p["ln_w"][None, :]
    conv_b = p["conv_b"][None, :]
    outnorm_w = p["outnorm_w"][None, :]
    skip_w = p["skip_w"][None, :]
    causal = jnp.tril(jnp.ones((S, S), dtype=bool))

    def one(xb):                                           # (S, E)
        mu = jnp.mean(xb, axis=-1, keepdims=True)
        xc = xb - mu
        var = jnp.mean(xc * xc, axis=-1, keepdims=True)
        xn = xc * lax.rsqrt(var + LN_EPS) * (1.0 + ln_w)
        xi = xn @ p["w_up"]
        x_m, z = xi[:, :ID], xi[:, ID:]
        pad = jnp.concatenate([jnp.zeros((KCONV - 1, ID), jnp.float32), x_m], axis=0)
        conv = conv_b + sum(pad[j:j + S, :] * p["conv_w"][j][None, :]
                            for j in range(KCONV))
        conv_act = conv * jax.nn.sigmoid(conv)
        q = conv_act @ p["w_q"]
        k = conv_act @ p["w_k"]
        v = x_m @ p["w_v"]
        cat = jnp.concatenate([q, k, v], axis=-1)
        ig = cat @ p["w_ig"] + p["b_ig"][None, :]
        fg = cat @ p["w_fg"] + p["b_fg"][None, :]
        logf = jax.nn.log_sigmoid(fg)
        csum = jnp.cumsum(logf, axis=0)
        outs = []
        for h in range(NH):
            sl = slice(h * DH, (h + 1) * DH)
            ld = csum[:, h][:, None] - csum[:, h][None, :] + ig[:, h][None, :]
            ld = jnp.where(causal, ld, -jnp.inf)
            m = jnp.max(ld, axis=-1, keepdims=True)
            d = jnp.exp(ld - m)
            qh, kh, vh = q[:, sl], k[:, sl], v[:, sl]
            c = (qh @ kh.T) * (1.0 / math.sqrt(DH)) * d
            norm = jnp.maximum(jnp.abs(jnp.sum(c, axis=-1, keepdims=True)), jnp.exp(-m))
            ht = (c / (norm + CELL_EPS)) @ vh
            hm = jnp.mean(ht, axis=-1, keepdims=True)
            hcv = ht - hm
            hv = jnp.mean(hcv * hcv, axis=-1, keepdims=True)
            outs.append(hcv * lax.rsqrt(hv + GN_EPS) * (1.0 + outnorm_w[:, sl]))
        h_norm = jnp.concatenate(outs, axis=-1)
        h_state = (h_norm + skip_w * conv_act) * (z * jax.nn.sigmoid(z))
        y = h_state @ p["w_down"]
        return xb + y

    return jax.vmap(one)(x)


if __name__ == "__main__":
    key = jax.random.PRNGKey(0)
    kx, kp = jax.random.split(key)
    x = jax.random.normal(kx, (B, S, E), dtype=jnp.float32)
    params = init_params(kp)
    packed = pack_params(params)

    out = xlstm_block_forward(x, packed)
    out = jax.block_until_ready(out)

    ref = reference_forward(x, params)
    ref = jax.block_until_ready(ref)

    assert out.shape == (B, S, E)
    assert bool(jnp.all(jnp.isfinite(out)))
    # The kernel runs its three big projections (up / q|k / down) with bf16 weights on
    # the MXU (per perf feedback) while keeping all decay/stabilization math in f32, so
    # tolerances vs. the pure-f32 reference are sized for bf16 matmul rounding.
    max_abs = float(jnp.max(jnp.abs(out - ref)))
    rel_fro = float(jnp.linalg.norm(out - ref) / jnp.linalg.norm(ref))
    assert max_abs < 0.15 and rel_fro < 0.03, (max_abs, rel_fro)
    print("KERNEL_OK")
</pallas_src>

<mosaic_0001>
module attributes {stable_mosaic.version = 11 : i64} {
  func.func @_xlstm_block_kernel(%arg0: memref<16x32xf32, #tpu.memory_space<vmem>>, %arg1: memref<32x384xbf16, #tpu.memory_space<vmem>>, %arg2: memref<128x256xbf16, #tpu.memory_space<vmem>>, %arg3: memref<8x256xf32, #tpu.memory_space<vmem>>, %arg4: memref<8x384xf32, #tpu.memory_space<vmem>>, %arg5: memref<8x1xf32, #tpu.memory_space<vmem>>, %arg6: memref<128x32xbf16, #tpu.memory_space<vmem>>, %arg7: memref<64x768xf32, #tpu.memory_space<vmem>>, %arg8: memref<16x384xf32, #tpu.memory_space<vmem>>, %arg9: memref<128x128xf32, #tpu.memory_space<vmem>>, %arg10: memref<8x128xf32, #tpu.memory_space<vmem>>, %arg11: memref<16x32xf32, #tpu.memory_space<vmem>>) attributes {dimension_semantics = [], scalar_prefetch = 0 : i64, scratch_operands = 0 : i64, tpu.core_type = #tpu.core_type<tc>} {
    %c0 = arith.constant 0 : index
    %c0_0 = arith.constant 0 : index
    %0 = vector.load %arg0[%c0, %c0_0] : memref<16x32xf32, #tpu.memory_space<vmem>>, vector<16x32xf32>
    %c0_1 = arith.constant 0 : index
    %c0_2 = arith.constant 0 : index
    %1 = vector.load %arg10[%c0_1, %c0_2] : memref<8x128xf32, #tpu.memory_space<vmem>>, vector<1x128xf32>
    %c1 = arith.constant 1 : index
    %c0_3 = arith.constant 0 : index
    %2 = vector.load %arg10[%c1, %c0_3] : memref<8x128xf32, #tpu.memory_space<vmem>>, vector<1x128xf32>
    %c2 = arith.constant 2 : index
    %c0_4 = arith.constant 0 : index
    %3 = vector.load %arg10[%c2, %c0_4] : memref<8x128xf32, #tpu.memory_space<vmem>>, vector<1x128xf32>
    %c3 = arith.constant 3 : index
    %c0_5 = arith.constant 0 : index
    %4 = vector.load %arg10[%c3, %c0_5] : memref<8x128xf32, #tpu.memory_space<vmem>>, vector<1x32xf32>
    %c0_6 = arith.constant 0 : index
    %c0_7 = arith.constant 0 : index
    %5 = vector.load %arg7[%c0_6, %c0_7] : memref<64x768xf32, #tpu.memory_space<vmem>>, vector<64x16xf32>
    %c0_8 = arith.constant 0 : index
    %c128 = arith.constant 128 : index
    %6 = vector.load %arg7[%c0_8, %c128] : memref<64x768xf32, #tpu.memory_space<vmem>>, vector<64x128xf32>
    %c0_9 = arith.constant 0 : index
    %c256 = arith.constant 256 : index
    %7 = vector.load %arg7[%c0_9, %c256] : memref<64x768xf32, #tpu.memory_space<vmem>>, vector<64x4xf32>
    %c0_10 = arith.constant 0 : index
    %c384 = arith.constant 384 : index
    %8 = vector.load %arg7[%c0_10, %c384] : memref<64x768xf32, #tpu.memory_space<vmem>>, vector<64x16xf32>
    %c0_11 = arith.constant 0 : index
    %c512 = arith.constant 512 : index
    %9 = vector.load %arg7[%c0_11, %c512] : memref<64x768xf32, #tpu.memory_space<vmem>>, vector<64x128xf32>
    %c0_12 = arith.constant 0 : index
    %c640 = arith.constant 640 : index
    %10 = vector.load %arg7[%c0_12, %c640] : memref<64x768xf32, #tpu.memory_space<vmem>>, vector<64x128xf32>
    %c0_13 = arith.constant 0 : index
    %c0_14 = arith.constant 0 : index
    %11 = vector.load %arg8[%c0_13, %c0_14] : memref<16x384xf32, #tpu.memory_space<vmem>>, vector<16x64xf32>
    %c0_15 = arith.constant 0 : index
    %c128_16 = arith.constant 128 : index
    %12 = vector.load %arg8[%c0_15, %c128_16] : memref<16x384xf32, #tpu.memory_space<vmem>>, vector<16x64xf32>
    %c0_17 = arith.constant 0 : index
    %c256_18 = arith.constant 256 : index
    %13 = vector.load %arg8[%c0_17, %c256_18] : memref<16x384xf32, #tpu.memory_space<vmem>>, vector<16x16xf32>
    %c0_19 = arith.constant 0 : index
    %c0_20 = arith.constant 0 : index
    %14 = vector.load %arg9[%c0_19, %c0_20] : memref<128x128xf32, #tpu.memory_space<vmem>>, vector<128x128xf32>
    %cst = arith.constant dense<0.000000e+00> : vector<16xf32>
    %15 = vector.multi_reduction <add>, %0, %cst [1] : vector<16x32xf32> to vector<16xf32>
    %16 = vector.shape_cast %15 : vector<16xf32> to vector<16x1xf32>
    %cst_21 = arith.constant 3.200000e+01 : f32
    %17 = vector.broadcast %cst_21 : f32 to vector<16x1xf32>
    %18 = arith.divf %16, %17 : vector<16x1xf32>
    %19 = vector.broadcast %18 : vector<16x1xf32> to vector<16x32xf32>
    %20 = arith.subf %0, %19 : vector<16x32xf32>
    %21 = arith.mulf %20, %20 : vector<16x32xf32>
    %cst_22 = arith.constant dense<0.000000e+00> : vector<16xf32>
    %22 = vector.multi_reduction <add>, %21, %cst_22 [1] : vector<16x32xf32> to vector<16xf32>
    %23 = vector.shape_cast %22 : vector<16xf32> to vector<16x1xf32>
    %cst_23 = arith.constant 3.200000e+01 : f32
    %24 = vector.broadcast %cst_23 : f32 to vector<16x1xf32>
    %25 = arith.divf %23, %24 : vector<16x1xf32>
    %cst_24 = arith.constant 9.99999974E-6 : f32
    %26 = vector.broadcast %cst_24 : f32 to vector<16x1xf32>
    %27 = arith.addf %25, %26 : vector<16x1xf32>
    %28 = math.rsqrt %27 : vector<16x1xf32>
    %29 = vector.broadcast %28 : vector<16x1xf32> to vector<16x32xf32>
    %30 = arith.mulf %20, %29 : vector<16x32xf32>
    %cst_25 = arith.constant 1.000000e+00 : f32
    %31 = vector.broadcast %cst_25 : f32 to vector<1x32xf32>
    %32 = arith.addf %31, %4 : vector<1x32xf32>
    %33 = vector.broadcast %32 : vector<1x32xf32> to vector<16x32xf32>
    %34 = arith.mulf %30, %33 : vector<16x32xf32>
    %35 = arith.truncf %34 : vector<16x32xf32> to vector<16x32xbf16>
    %c0_26 = arith.constant 0 : index
    %c0_27 = arith.constant 0 : index
    %36 = vector.load %arg1[%c0_26, %c0_27] : memref<32x384xbf16, #tpu.memory_space<vmem>>, vector<32x384xbf16>
    %cst_28 = arith.constant dense<0.000000e+00> : vector<16x384xf32>
    %37 = tpu.matmul %35, %36, %cst_28 {dimension_numbers = #tpu.dot_dimension_numbers<[1], [0], [0], [1], [0, 0, 1, 1], [], []>} : vector<16x32xbf16>, vector<32x384xbf16>, vector<16x384xf32> -> vector<16x384xf32>
    %38 = vector.extract_strided_slice %37 {offsets = [0, 0], sizes = [16, 128], strides = [1, 1]} : vector<16x384xf32> to vector<16x128xf32>
    %39 = vector.extract_strided_slice %37 {offsets = [0, 128], sizes = [16, 128], strides = [1, 1]} : vector<16x384xf32> to vector<16x128xf32>
    %40 = vector.extract_strided_slice %37 {offsets = [0, 256], sizes = [16, 128], strides = [1, 1]} : vector<16x384xf32> to vector<16x128xf32>
    %cst_29 = arith.constant dense<0.000000e+00> : vector<64x128xf32>
    %41 = tpu.matmul %5, %38, %cst_29 {dimension_numbers = #tpu.dot_dimension_numbers<[1], [0], [0], [1], [0, 0, 1, 1], [], []>} : vector<64x16xf32>, vector<16x128xf32>, vector<64x128xf32> -> vector<64x128xf32>
    %42 = arith.mulf %41, %6 : vector<64x128xf32>
    %cst_30 = arith.constant dense<0.000000e+00> : vector<16x128xf32>
    %43 = tpu.matmul %11, %42, %cst_30 {dimension_numbers = #tpu.dot_dimension_numbers<[1], [0], [0], [1], [0, 0, 1, 1], [], []>} : vector<16x64xf32>, vector<64x128xf32>, vector<16x128xf32> -> vector<16x128xf32>
    %44 = vector.broadcast %1 : vector<1x128xf32> to vector<16x128xf32>
    %45 = arith.addf %43, %44 : vector<16x128xf32>
    %cst_31 = arith.constant 0.000000e+00 : f32
    %46 = vector.broadcast %cst_31 : f32 to vector<16x128xf32>
    %47 = arith.subf %46, %45 : vector<16x128xf32>
    %48 = math.exp %47 : vector<16x128xf32>
    %cst_32 = arith.constant 1.000000e+00 : f32
    %49 = vector.broadcast %cst_32 : f32 to vector<16x128xf32>
    %50 = arith.addf %49, %48 : vector<16x128xf32>
    %cst_33 = arith.constant 1.000000e+00 : f32
    %51 = vector.broadcast %cst_33 : f32 to vector<16x128xf32>
    %52 = arith.divf %51, %50 : vector<16x128xf32>
    %53 = arith.mulf %45, %52 : vector<16x128xf32>
    %54 = arith.truncf %53 : vector<16x128xf32> to vector<16x128xbf16>
    %c0_34 = arith.constant 0 : index
    %c0_35 = arith.constant 0 : index
    %55 = vector.load %arg2[%c0_34, %c0_35] : memref<128x256xbf16, #tpu.memory_space<vmem>>, vector<128x256xbf16>
    %cst_36 = arith.constant dense<0.000000e+00> : vector<16x256xf32>
    %56 = tpu.matmul %54, %55, %cst_36 {dimension_numbers = #tpu.dot_dimension_numbers<[1], [0], [0], [1], [0, 0, 1, 1], [], []>} : vector<16x128xbf16>, vector<128x256xbf16>, vector<16x256xf32> -> vector<16x256xf32>
    %57 = vector.extract_strided_slice %56 {offsets = [0, 0], sizes = [16, 128], strides = [1, 1]} : vector<16x256xf32> to vector<16x128xf32>
    %58 = vector.extract_strided_slice %56 {offsets = [0, 128], sizes = [16, 128], strides = [1, 1]} : vector<16x256xf32> to vector<16x128xf32>
    %c0_37 = arith.constant 0 : index
    %c0_38 = arith.constant 0 : index
    %59 = vector.load %arg3[%c0_37, %c0_38] : memref<8x256xf32, #tpu.memory_space<vmem>>, vector<8x256xf32>
    %cst_39 = arith.constant dense<0.000000e+00> : vector<8x16xf32>
    %60 = tpu.matmul %59, %56, %cst_39 {dimension_numbers = #tpu.dot_dimension_numbers<[1], [1], [0], [0], [0, 0, 1, 0], [], []>} : vector<8x256xf32>, vector<16x256xf32>, vector<8x16xf32> -> vector<8x16xf32>
    %c0_40 = arith.constant 0 : index
    %c0_41 = arith.constant 0 : index
    %61 = vector.load %arg4[%c0_40, %c0_41] : memref<8x384xf32, #tpu.memory_space<vmem>>, vector<8x384xf32>
    %cst_42 = arith.constant dense<0.000000e+00> : vector<8x16xf32>
    %62 = tpu.matmul %61, %37, %cst_42 {dimension_numbers = #tpu.dot_dimension_numbers<[1], [1], [0], [0], [0, 0, 1, 0], [], []>} : vector<8x384xf32>, vector<16x384xf32>, vector<8x16xf32> -> vector<8x16xf32>
    %63 = arith.addf %60, %62 : vector<8x16xf32>
    %c0_43 = arith.constant 0 : index
    %c0_44 = arith.constant 0 : index
    %64 = vector.load %arg5[%c0_43, %c0_44] : memref<8x1xf32, #tpu.memory_space<vmem>>, vector<8x1xf32>
    %65 = vector.broadcast %64 : vector<8x1xf32> to vector<8x16xf32>
    %66 = arith.addf %63, %65 : vector<8x16xf32>
    %67 = vector.extract_strided_slice %66 {offsets = [0, 0], sizes = [4, 16], strides = [1, 1]} : vector<8x16xf32> to vector<4x16xf32>
    %68 = vector.extract_strided_slice %66 {offsets = [4, 0], sizes = [4, 16], strides = [1, 1]} : vector<8x16xf32> to vector<4x16xf32>
    %cst_45 = arith.constant 0.000000e+00 : f32
    %69 = vector.broadcast %cst_45 : f32 to vector<4x16xf32>
    %70 = arith.minimumf %68, %69 : vector<4x16xf32>
    %71 = math.absf %68 : vector<4x16xf32>
    %cst_46 = arith.constant 0.000000e+00 : f32
    %72 = vector.broadcast %cst_46 : f32 to vector<4x16xf32>
    %73 = arith.subf %72, %71 : vector<4x16xf32>
    %74 = math.exp %73 : vector<4x16xf32>
    %cst_47 = arith.constant 1.000000e+00 : f32
    %75 = vector.broadcast %cst_47 : f32 to vector<4x16xf32>
    %76 = arith.addf %75, %74 : vector<4x16xf32>
    %77 = math.log %76 : vector<4x16xf32>
    %78 = arith.subf %70, %77 : vector<4x16xf32>
    %cst_48 = arith.constant dense<0.000000e+00> : vector<4x16xf32>
    %79 = tpu.matmul %78, %13, %cst_48 {dimension_numbers = #tpu.dot_dimension_numbers<[1], [1], [0], [0], [0, 0, 1, 0], [], []>} : vector<4x16xf32>, vector<16x16xf32>, vector<4x16xf32> -> vector<4x16xf32>
    %80 = arith.subf %67, %79 : vector<4x16xf32>
    %cst_49 = arith.constant dense<0.000000e+00> : vector<64x16xf32>
    %81 = tpu.matmul %7, %80, %cst_49 {dimension_numbers = #tpu.dot_dimension_numbers<[1], [0], [0], [1], [0, 0, 1, 1], [], []>} : vector<64x4xf32>, vector<4x16xf32>, vector<64x16xf32> -> vector<64x16xf32>
    %cst_50 = arith.constant dense<0.000000e+00> : vector<64x16xf32>
    %82 = tpu.matmul %7, %79, %cst_50 {dimension_numbers = #tpu.dot_dimension_numbers<[1], [0], [0], [1], [0, 0, 1, 1], [], []>} : vector<64x4xf32>, vector<4x16xf32>, vector<64x16xf32> -> vector<64x16xf32>
    %83 = arith.mulf %82, %5 : vector<64x16xf32>
    %cst_51 = arith.constant dense<0.000000e+00> : vector<64xf32>
    %84 = vector.multi_reduction <add>, %83, %cst_51 [1] : vector<64x16xf32> to vector<64xf32>
    %85 = vector.shape_cast %84 : vector<64xf32> to vector<64x1xf32>
    %86 = vector.broadcast %85 : vector<64x1xf32> to vector<64x16xf32>
    %87 = arith.addf %86, %81 : vector<64x16xf32>
    %88 = arith.addf %87, %8 : vector<64x16xf32>
    %cst_52 = arith.constant dense<0xFF800000> : vector<64xf32>
    %89 = vector.multi_reduction <maximumf>, %88, %cst_52 [1] : vector<64x16xf32> to vector<64xf32>
    %90 = vector.shape_cast %89 : vector<64xf32> to vector<64x1xf32>
    %91 = vector.broadcast %90 : vector<64x1xf32> to vector<64x16xf32>
    %92 = arith.subf %88, %91 : vector<64x16xf32>
    %93 = math.exp %92 : vector<64x16xf32>
    %cst_53 = arith.constant dense<0.000000e+00> : vector<64x128xf32>
    %94 = tpu.matmul %5, %57, %cst_53 {dimension_numbers = #tpu.dot_dimension_numbers<[1], [0], [0], [1], [0, 0, 1, 1], [], []>} : vector<64x16xf32>, vector<16x128xf32>, vector<64x128xf32> -> vector<64x128xf32>
    %95 = arith.mulf %94, %9 : vector<64x128xf32>
    %cst_54 = arith.constant dense<0.000000e+00> : vector<64x16xf32>
    %96 = tpu.matmul %95, %58, %cst_54 {dimension_numbers = #tpu.dot_dimension_numbers<[1], [1], [0], [0], [0, 0, 1, 0], [], []>} : vector<64x128xf32>, vector<16x128xf32>, vector<64x16xf32> -> vector<64x16xf32>
    %97 = arith.mulf %96, %93 : vector<64x16xf32>
    %cst_55 = arith.constant dense<0.000000e+00> : vector<64xf32>
    %98 = vector.multi_reduction <add>, %97, %cst_55 [1] : vector<64x16xf32> to vector<64xf32>
    %99 = vector.shape_cast %98 : vector<64xf32> to vector<64x1xf32>
    %100 = math.absf %99 : vector<64x1xf32>
    %cst_56 = arith.constant 0.000000e+00 : f32
    %101 = vector.broadcast %cst_56 : f32 to vector<64x1xf32>
    %102 = arith.subf %101, %90 : vector<64x1xf32>
    %103 = math.exp %102 : vector<64x1xf32>
    %104 = arith.maximumf %100, %103 : vector<64x1xf32>
    %cst_57 = arith.constant 9.99999997E-7 : f32
    %105 = vector.broadcast %cst_57 : f32 to vector<64x1xf32>
    %106 = arith.addf %104, %105 : vector<64x1xf32>
    %107 = tpu.reciprocal %106 {approx = true} : vector<64x1xf32> -> vector<64x1xf32>
    %108 = vector.broadcast %107 : vector<64x1xf32> to vector<64x16xf32>
    %109 = arith.mulf %97, %108 : vector<64x16xf32>
    %cst_58 = arith.constant dense<0.000000e+00> : vector<64x128xf32>
    %110 = tpu.matmul %109, %40, %cst_58 {dimension_numbers = #tpu.dot_dimension_numbers<[1], [0], [0], [1], [0, 0, 1, 1], [], []>} : vector<64x16xf32>, vector<16x128xf32>, vector<64x128xf32> -> vector<64x128xf32>
    %111 = arith.mulf %110, %10 : vector<64x128xf32>
    %cst_59 = arith.constant dense<0.000000e+00> : vector<16x128xf32>
    %112 = tpu.matmul %12, %111, %cst_59 {dimension_numbers = #tpu.dot_dimension_numbers<[1], [0], [0], [1], [0, 0, 1, 1], [], []>} : vector<16x64xf32>, vector<64x128xf32>, vector<16x128xf32> -> vector<16x128xf32>
    %cst_60 = arith.constant dense<0.000000e+00> : vector<16x128xf32>
    %113 = tpu.matmul %112, %14, %cst_60 {dimension_numbers = #tpu.dot_dimension_numbers<[1], [0], [0], [1], [0, 0, 1, 1], [], []>} : vector<16x128xf32>, vector<128x128xf32>, vector<16x128xf32> -> vector<16x128xf32>
    %114 = arith.subf %112, %113 : vector<16x128xf32>
    %115 = arith.mulf %114, %114 : vector<16x128xf32>
    %cst_61 = arith.constant dense<0.000000e+00> : vector<16x128xf32>
    %116 = tpu.matmul %115, %14, %cst_61 {dimension_numbers = #tpu.dot_dimension_numbers<[1], [0], [0], [1], [0, 0, 1, 1], [], []>} : vector<16x128xf32>, vector<128x128xf32>, vector<16x128xf32> -> vector<16x128xf32>
    %cst_62 = arith.constant 9.99999974E-6 : f32
    %117 = vector.broadcast %cst_62 : f32 to vector<16x128xf32>
    %118 = arith.addf %116, %117 : vector<16x128xf32>
    %119 = math.rsqrt %118 : vector<16x128xf32>
    %120 = arith.mulf %114, %119 : vector<16x128xf32>
    %cst_63 = arith.constant 1.000000e+00 : f32
    %121 = vector.broadcast %cst_63 : f32 to vector<1x128xf32>
    %122 = arith.addf %121, %2 : vector<1x128xf32>
    %123 = vector.broadcast %122 : vector<1x128xf32> to vector<16x128xf32>
    %124 = arith.mulf %120, %123 : vector<16x128xf32>
    %cst_64 = arith.constant 0.000000e+00 : f32
    %125 = vector.broadcast %cst_64 : f32 to vector<16x128xf32>
    %126 = arith.subf %125, %39 : vector<16x128xf32>
    %127 = math.exp %126 : vector<16x128xf32>
    %cst_65 = arith.constant 1.000000e+00 : f32
    %128 = vector.broadcast %cst_65 : f32 to vector<16x128xf32>
    %129 = arith.addf %128, %127 : vector<16x128xf32>
    %cst_66 = arith.constant 1.000000e+00 : f32
    %130 = vector.broadcast %cst_66 : f32 to vector<16x128xf32>
    %131 = arith.divf %130, %129 : vector<16x128xf32>
    %132 = arith.mulf %39, %131 : vector<16x128xf32>
    %133 = vector.broadcast %3 : vector<1x128xf32> to vector<16x128xf32>
    %134 = arith.mulf %133, %53 : vector<16x128xf32>
    %135 = arith.addf %124, %134 : vector<16x128xf32>
    %136 = arith.mulf %135, %132 : vector<16x128xf32>
    %137 = arith.truncf %136 : vector<16x128xf32> to vector<16x128xbf16>
    %c0_67 = arith.constant 0 : index
    %c0_68 = arith.constant 0 : index
    %138 = vector.load %arg6[%c0_67, %c0_68] : memref<128x32xbf16, #tpu.memory_space<vmem>>, vector<128x32xbf16>
    %cst_69 = arith.constant dense<0.000000e+00> : vector<16x32xf32>
    %139 = tpu.matmul %137, %138, %cst_69 {dimension_numbers = #tpu.dot_dimension_numbers<[1], [0], [0], [1], [0, 0, 1, 1], [], []>} : vector<16x128xbf16>, vector<128x32xbf16>, vector<16x32xf32> -> vector<16x32xf32>
    %140 = arith.addf %0, %139 : vector<16x32xf32>
    %c0_70 = arith.constant 0 : index
    %c0_71 = arith.constant 0 : index
    %141 = vector.load %arg11[%c0_70, %c0_71] : memref<16x32xf32, #tpu.memory_space<vmem>>, vector<16x32xf32>
    tpu.vector_store %arg11[%c0_70, %c0_71], %140 {strides = array<i32>} : memref<16x32xf32, #tpu.memory_space<vmem>>, vector<16x32xf32>,
    return
  }
}

</mosaic_0001>

<llo_original>
// kernel: tpu_custom_call.1
$region0: #{tpu_custom_call.1}
  #allocation0 [shape = 'u32[]', space=smem, size = 0x4, offset = 0x4, fixed_abs, tag = 'smem constant byte address 0x4 - core index']
  #allocation1 [shape = 'u32[144,128]{1,0:T(1,128)}', space=vmem, size = 0x12000, scoped, tag = 'internal scratch']
  %s0 = inlined_call_operand.hbm [shape: f32[16,32], index: 0, kind: input, shape index: {}]
  %s1 = inlined_call_operand.vmem [shape: bf16[32,384], index: 1, kind: input, shape index: {}]
  %s2 = inlined_call_operand.hbm [shape: bf16[128,256], index: 2, kind: input, shape index: {}]
  %s3 = inlined_call_operand.hbm [shape: f32[8,256], index: 3, kind: input, shape index: {}]
  %s4 = inlined_call_operand.hbm [shape: f32[8,384], index: 4, kind: input, shape index: {}]
  %s5 = inlined_call_operand.vmem [shape: f32[8,1], index: 5, kind: input, shape index: {}]
  %s6 = inlined_call_operand.vmem [shape: bf16[128,32], index: 6, kind: input, shape index: {}]
  %s7 = inlined_call_operand.hbm [shape: f32[64,768], index: 7, kind: input, shape index: {}]
  %s8 = inlined_call_operand.vmem [shape: f32[16,384], index: 8, kind: input, shape index: {}]
  %s9 = inlined_call_operand.hbm [shape: f32[128,128], index: 9, kind: input, shape index: {}]
  %s10 = inlined_call_operand.vmem [shape: f32[8,128], index: 10, kind: input, shape index: {}]
  %s11 = inlined_call_operand.hbm [shape: f32[16,32], index: 11, kind: output, shape index: {}]
  %s12 = sld [smem:[#allocation0]]
  $region78: #{tpu_custom_call.1} parent=0
    _
  %s14 = ssub.s32 1, %s12
  %s15 = scalar_select 0, %s14, %s12
  $region1: #{tpu_custom_call.1} parent=0
    #allocation2 [shape = 'u8[8192]{0}', space=vmem, size = 0x2000, scoped, tag = 'input window, operand 0, single buffered']
    #allocation3 [shape = 's32[1]{0}', space=sflag, size = 0x4, scoped, tag = 'scoped memory for tpu_custom_call.1']
    #allocation4 [shape = 's32[1]{0}', space=sflag, size = 0x4, scoped, tag = 'scoped memory for tpu_custom_call.1']
    #allocation5 [shape = 'u8[65536]{0}', space=vmem, size = 0x10000, scoped, tag = 'input window, operand 2, single buffered']
    #allocation6 [shape = 's32[1]{0}', space=sflag, size = 0x4, scoped, tag = 'scoped memory for tpu_custom_call.1']
    #allocation7 [shape = 'u8[8192]{0}', space=vmem, size = 0x2000, scoped, tag = 'input window, operand 3, single buffered']
    #allocation8 [shape = 'u8[12288]{0}', space=vmem, size = 0x3000, scoped, tag = 'input window, operand 4, single buffered']
    #allocation9 [shape = 's32[1]{0}', space=sflag, size = 0x4, scoped, tag = 'scoped memory for tpu_custom_call.1']
    #allocation10 [shape = 'u8[196608]{0}', space=vmem, size = 0x30000, scoped, tag = 'input window, operand 7, single buffered']
    #allocation11 [shape = 'u8[65536]{0}', space=vmem, size = 0x10000, scoped, tag = 'input window, operand 9, single buffered']
    #allocation12 [shape = 's32[1]{0}', space=sflag, size = 0x4, scoped, tag = 'scoped memory for tpu_custom_call.1']
    #allocation13 [shape = 'u8[8192]{0}', space=vmem, size = 0x2000, scoped, tag = 'output window, operand 0, single buffered']
    %16 = vsyncpa [#allocation3], 0
    %17 = vsyncpa [#allocation6], 0
    %18 = vsyncpa [#allocation9], 0
    %19 = vsyncpa [#allocation12], 0
    %20 = vsyncpa [#allocation4], 0
    // Predicated region
    $region2: #{tpu_custom_call.1} parent=1 // pred_check
      _
    $region3: #{tpu_custom_call.1} parent=1 // pred_check_branch
      %22 = sbr.rel (0) target = $region5
    $region4: #{tpu_custom_call.1} parent=1 // pred_region
      %s24 = ssub.s32 256, 256
      %25 = vsyncadd [#allocation3], %s24
      %s26 = sshll.u32 [#allocation2], 4
      %s27 = int_to_ptr.vmem [resolvable:$true] %s26
      %32 = dma.hbm_to_vmem [thread:$0]  %s0, 256, %s27, [#allocation3], 128, 128, 8
    $region5: #{tpu_custom_call.1} parent=1 // pred_fallthru
      _
    // Predicated region
    $region6: #{tpu_custom_call.1} parent=1 // pred_check
      _
    $region7: #{tpu_custom_call.1} parent=1 // pred_check_branch
      %34 = sbr.rel (0) target = $region9
    $region8: #{tpu_custom_call.1} parent=1 // pred_region
      _
    $region9: #{tpu_custom_call.1} parent=1 // pred_fallthru
      _
    // Predicated region
    $region10: #{tpu_custom_call.1} parent=1 // pred_check
      _
    $region11: #{tpu_custom_call.1} parent=1 // pred_check_branch
      %36 = sbr.rel (0) target = $region13
    $region12: #{tpu_custom_call.1} parent=1 // pred_region
      %s38 = ssub.s32 2048, 2048
      %39 = vsyncadd [#allocation6], %s38
      %s40 = sshll.u32 [#allocation5], 4
      %s41 = int_to_ptr.vmem [resolvable:$true] %s40
      %46 = dma.hbm_to_vmem [thread:$0]  %s2, 2048, %s41, [#allocation6], 128, 128, 8
    $region13: #{tpu_custom_call.1} parent=1 // pred_fallthru
      _
    // Predicated region
    $region14: #{tpu_custom_call.1} parent=1 // pred_check
      _
    $region15: #{tpu_custom_call.1} parent=1 // pred_check_branch
      %48 = sbr.rel (0) target = $region17
    $region16: #{tpu_custom_call.1} parent=1 // pred_region
      %s50 = ssub.s32 256, 256
      %51 = vsyncadd [#allocation6], %s50
      %s53 = sshll.u32 [#allocation7], 4
      %s54 = int_to_ptr.vmem [resolvable:$true] %s53
      %56 = dma.hbm_to_vmem [thread:$0]  %s3, 256, %s54, [#allocation6]
    $region17: #{tpu_custom_call.1} parent=1 // pred_fallthru
      _
    // Predicated region
    $region18: #{tpu_custom_call.1} parent=1 // pred_check
      _
    $region19: #{tpu_custom_call.1} parent=1 // pred_check_branch
      %58 = sbr.rel (0) target = $region21
    $region20: #{tpu_custom_call.1} parent=1 // pred_region
      %s60 = ssub.s32 384, 384
      %61 = vsyncadd [#allocation9], %s60
      %s63 = sshll.u32 [#allocation8], 4
      %s64 = int_to_ptr.vmem [resolvable:$true] %s63
      %66 = dma.hbm_to_vmem [thread:$0]  %s4, 384, %s64, [#allocation9]
    $region21: #{tpu_custom_call.1} parent=1 // pred_fallthru
      _
    // Predicated region
    $region22: #{tpu_custom_call.1} parent=1 // pred_check
      _
    $region23: #{tpu_custom_call.1} parent=1 // pred_check_branch
      %68 = sbr.rel (0) target = $region25
    $region24: #{tpu_custom_call.1} parent=1 // pred_region
      _
    $region25: #{tpu_custom_call.1} parent=1 // pred_fallthru
      _
    // Predicated region
    $region26: #{tpu_custom_call.1} parent=1 // pred_check
      _
    $region27: #{tpu_custom_call.1} parent=1 // pred_check_branch
      %70 = sbr.rel (0) target = $region29
    $region28: #{tpu_custom_call.1} parent=1 // pred_region
      _
    $region29: #{tpu_custom_call.1} parent=1 // pred_fallthru
      _
    // Predicated region
    $region30: #{tpu_custom_call.1} parent=1 // pred_check
      _
    $region31: #{tpu_custom_call.1} parent=1 // pred_check_branch
      %72 = sbr.rel (0) target = $region33
    $region32: #{tpu_custom_call.1} parent=1 // pred_region
      %s74 = ssub.s32 6144, 6144
      %75 = vsyncadd [#allocation9], %s74
      %s76 = sshll.u32 [#allocation10], 4
      %s77 = int_to_ptr.vmem [resolvable:$true] %s76
      %82 = dma.hbm_to_vmem [thread:$0]  %s7, 6144, %s77, [#allocation9], 768, 768, 48
    $region33: #{tpu_custom_call.1} parent=1 // pred_fallthru
      _
    // Predicated region
    $region34: #{tpu_custom_call.1} parent=1 // pred_check
      _
    $region35: #{tpu_custom_call.1} parent=1 // pred_check_branch
      %84 = sbr.rel (0) target = $region37
    $region36: #{tpu_custom_call.1} parent=1 // pred_region
      _
    $region37: #{tpu_custom_call.1} parent=1 // pred_fallthru
      _
    // Predicated region
    $region38: #{tpu_custom_call.1} parent=1 // pred_check
      _
    $region39: #{tpu_custom_call.1} parent=1 // pred_check_branch
      %86 = sbr.rel (0) target = $region41
    $region40: #{tpu_custom_call.1} parent=1 // pred_region
      %s88 = ssub.s32 2048, 2048
      %89 = vsyncadd [#allocation12], %s88
      %s90 = sshll.u32 [#allocation11], 4
      %s91 = int_to_ptr.vmem [resolvable:$true] %s90
      %96 = dma.hbm_to_vmem [thread:$0]  %s9, 2048, %s91, [#allocation12], 128, 128, 8
    $region41: #{tpu_custom_call.1} parent=1 // pred_fallthru
      _
    // Predicated region
    $region42: #{tpu_custom_call.1} parent=1 // pred_check
      _
    $region43: #{tpu_custom_call.1} parent=1 // pred_check_branch
      %98 = sbr.rel (0) target = $region45
    $region44: #{tpu_custom_call.1} parent=1 // pred_region
      _
    $region45: #{tpu_custom_call.1} parent=1 // pred_fallthru
      _
    // Predicated region
    $region46: #{tpu_custom_call.1} parent=1 // pred_check
      _
    $region47: #{tpu_custom_call.1} parent=1 // pred_check_branch
      %100 = sbr.rel (0) target = $region49
    $region48: #{tpu_custom_call.1} parent=1 // pred_region
      %101 = dma.done [#allocation3], 256
    $region49: #{tpu_custom_call.1} parent=1 // pred_fallthru
      _
    // Predicated region
    $region50: #{tpu_custom_call.1} parent=1 // pred_check
      _
    $region51: #{tpu_custom_call.1} parent=1 // pred_check_branch
      %103 = sbr.rel (0) target = $region53
    $region52: #{tpu_custom_call.1} parent=1 // pred_region
      %104 = dma.done [#allocation6], 2048
    $region53: #{tpu_custom_call.1} parent=1 // pred_fallthru
      _
    // Predicated region
    $region54: #{tpu_custom_call.1} parent=1 // pred_check
      _
    $region55: #{tpu_custom_call.1} parent=1 // pred_check_branch
      %106 = sbr.rel (0) target = $region57
    $region56: #{tpu_custom_call.1} parent=1 // pred_region
      %107 = dma.done [#allocation6], 256
    $region57: #{tpu_custom_call.1} parent=1 // pred_fallthru
      _
    // Predicated region
    $region58: #{tpu_custom_call.1} parent=1 // pred_check
      _
    $region59: #{tpu_custom_call.1} parent=1 // pred_check_branch
      %109 = sbr.rel (0) target = $region61
    $region60: #{tpu_custom_call.1} parent=1 // pred_region
      %110 = dma.done [#allocation9], 384
    $region61: #{tpu_custom_call.1} parent=1 // pred_fallthru
      _
    // Predicated region
    $region62: #{tpu_custom_call.1} parent=1 // pred_check
      _
    $region63: #{tpu_custom_call.1} parent=1 // pred_check_branch
      %112 = sbr.rel (0) target = $region65
    $region64: #{tpu_custom_call.1} parent=1 // pred_region
      %113 = dma.done [#allocation9], 6144
    $region65: #{tpu_custom_call.1} parent=1 // pred_fallthru
      _
    // Predicated region
    $region66: #{tpu_custom_call.1} parent=1 // pred_check
      _
    $region67: #{tpu_custom_call.1} parent=1 // pred_check_branch
      %115 = sbr.rel (0) target = $region69
    $region68: #{tpu_custom_call.1} parent=1 // pred_region
      %116 = dma.done [#allocation12], 2048
    $region69: #{tpu_custom_call.1} parent=1 // pred_fallthru
      _
    %v118 = vld [vmem:[#allocation2] sm:$0xff]
    %v119 = vld [vmem:[#allocation2 + $0x8] sm:$0xff]
    %v120 = vld [vmem:[%s10] sm:$0x1]
    %v121 = vld [vmem:[%s10 + $0x1] sm:$0x1]
    %v122 = vld [vmem:[%s10 + $0x2] sm:$0x1]
    %v123 = vld [vmem:[%s10 + $0x3] sm:$0x1]
    %v124 = vld [vmem:[#allocation10] sm:$0xff]
    %v125 = vld [vmem:[#allocation10 + $0x30] sm:$0xff]
    %v126 = vld [vmem:[#allocation10 + $0x60] sm:$0xff]
    %v127 = vld [vmem:[#allocation10 + $0x90] sm:$0xff]
    %v128 = vld [vmem:[#allocation10 + $0xc0] sm:$0xff]
    %v129 = vld [vmem:[#allocation10 + $0xf0] sm:$0xff]
    %v130 = vld [vmem:[#allocation10 + $0x120] sm:$0xff]
    %v131 = vld [vmem:[#allocation10 + $0x150] sm:$0xff]
    %v132 = vld [vmem:[#allocation10 + $0x8] sm:$0xff]
    %v133 = vld [vmem:[#allocation10 + $0x38] sm:$0xff]
    %v134 = vld [vmem:[#allocation10 + $0x68] sm:$0xff]
    %v135 = vld [vmem:[#allocation10 + $0x98] sm:$0xff]
    %v136 = vld [vmem:[#allocation10 + $0xc8] sm:$0xff]
    %v137 = vld [vmem:[#allocation10 + $0xf8] sm:$0xff]
    %v138 = vld [vmem:[#allocation10 + $0x128] sm:$0xff]
    %v139 = vld [vmem:[#allocation10 + $0x158] sm:$0xff]
    %v140 = vld [vmem:[#allocation10 + $0x10] sm:$0xff]
    %v141 = vld [vmem:[#allocation10 + $0x40] sm:$0xff]
    %v142 = vld [vmem:[#allocation10 + $0x70] sm:$0xff]
    %v143 = vld [vmem:[#allocation10 + $0xa0] sm:$0xff]
    %v144 = vld [vmem:[#allocation10 + $0xd0] sm:$0xff]
    %v145 = vld [vmem:[#allocation10 + $0x100] sm:$0xff]
    %v146 = vld [vmem:[#allocation10 + $0x130] sm:$0xff]
    %v147 = vld [vmem:[#allocation10 + $0x160] sm:$0xff]
    %v148 = vld [vmem:[#allocation10 + $0x18] sm:$0xff]
    %v149 = vld [vmem:[#allocation10 + $0x48] sm:$0xff]
    %v150 = vld [vmem:[#allocation10 + $0x78] sm:$0xff]
    %v151 = vld [vmem:[#allocation10 + $0xa8] sm:$0xff]
    %v152 = vld [vmem:[#allocation10 + $0xd8] sm:$0xff]
    %v153 = vld [vmem:[#allocation10 + $0x108] sm:$0xff]
    %v154 = vld [vmem:[#allocation10 + $0x138] sm:$0xff]
    %v155 = vld [vmem:[#allocation10 + $0x168] sm:$0xff]
    %v156 = vld [vmem:[#allocation10 + $0x20] sm:$0xff]
    %v157 = vld [vmem:[#allocation10 + $0x50] sm:$0xff]
    %v158 = vld [vmem:[#allocation10 + $0x80] sm:$0xff]
    %v159 = vld [vmem:[#allocation10 + $0xb0] sm:$0xff]
    %v160 = vld [vmem:[#allocation10 + $0xe0] sm:$0xff]
    %v161 = vld [vmem:[#allocation10 + $0x110] sm:$0xff]
    %v162 = vld [vmem:[#allocation10 + $0x140] sm:$0xff]
    %v163 = vld [vmem:[#allocation10 + $0x170] sm:$0xff]
    %v164 = vld [vmem:[#allocation10 + $0x28] sm:$0xff]
    %v165 = vld [vmem:[#allocation10 + $0x58] sm:$0xff]
    %v166 = vld [vmem:[#allocation10 + $0x88] sm:$0xff]
    %v167 = vld [vmem:[#allocation10 + $0xb8] sm:$0xff]
    %v168 = vld [vmem:[#allocation10 + $0xe8] sm:$0xff]
    %v169 = vld [vmem:[#allocation10 + $0x118] sm:$0xff]
    %v170 = vld [vmem:[#allocation10 + $0x148] sm:$0xff]
    %v171 = vld [vmem:[#allocation10 + $0x178] sm:$0xff]
    %v172 = vld [vmem:[%s8] sm:$0xff]
    %v173 = vld [vmem:[%s8 + $0x18] sm:$0xff]
    %v174 = vld [vmem:[%s8 + $0x8] sm:$0xff]
    %v175 = vld [vmem:[%s8 + $0x20] sm:$0xff]
    %v176 = vld [vmem:[%s8 + $0x10] sm:$0xff]
    %v177 = vld [vmem:[%s8 + $0x28] sm:$0xff]
    %v178 = vld [vmem:[#allocation11] sm:$0xff]
    %v179 = vld [vmem:[#allocation11 + $0x8] sm:$0xff]
    %v180 = vld [vmem:[#allocation11 + $0x10] sm:$0xff]
    %v181 = vld [vmem:[#allocation11 + $0x18] sm:$0xff]
    %v182 = vld [vmem:[#allocation11 + $0x20] sm:$0xff]
    %v183 = vld [vmem:[#allocation11 + $0x28] sm:$0xff]
    %v184 = vld [vmem:[#allocation11 + $0x30] sm:$0xff]
    %v185 = vld [vmem:[#allocation11 + $0x38] sm:$0xff]
    %v186 = vld [vmem:[#allocation11 + $0x40] sm:$0xff]
    %v187 = vld [vmem:[#allocation11 + $0x48] sm:$0xff]
    %v188 = vld [vmem:[#allocation11 + $0x50] sm:$0xff]
    %v189 = vld [vmem:[#allocation11 + $0x58] sm:$0xff]
    %v190 = vld [vmem:[#allocation11 + $0x60] sm:$0xff]
    %v191 = vld [vmem:[#allocation11 + $0x68] sm:$0xff]
    %v192 = vld [vmem:[#allocation11 + $0x70] sm:$0xff]
    %v193 = vld [vmem:[#allocation11 + $0x78] sm:$0xff]
    %vm194 = vcmask 261120
    %v195 = vsel %vm194, %v118, 0.0
    %196 = vadd.xlane.f32.xlu0 %v195
    %v197 = vpop.xlane.xlu0 %196
    %v198 = vsel %vm194, %v119, 0.0
    %199 = vadd.xlane.f32.xlu0 %v198
    %v200 = vpop.xlane.xlu0 %199
    %v201 = vrcp.pop 32.0
    %v202 = vmul.f32 %v197, %v201
    %v203 = vmul.f32 %v200, %v201
    %v204 = vsub.f32 %v118, %v202
    %v205 = vsub.f32 %v119, %v203
    %v206 = vmul.f32 %v204, %v204
    %v207 = vmul.f32 %v205, %v205
    %v208 = vsel %vm194, %v206, 0.0
    %209 = vadd.xlane.f32.xlu0 %v208
    %v210 = vpop.xlane.xlu0 %209
    %v211 = vsel %vm194, %v207, 0.0
    %212 = vadd.xlane.f32.xlu0 %v211
    %v213 = vpop.xlane.xlu0 %212
    %v214 = vmul.f32 %v210, %v201
    %v215 = vmul.f32 %v213, %v201
    %v216 = vadd.f32 %v214, 1e-05
    %v217 = vadd.f32 %v215, 1e-05
    %v218 = vrsqrt.pop %v216
    %v219 = vrsqrt.pop %v217
    %v220 = vmul.f32 %v204, %v218
    %v221 = vmul.f32 %v205, %v219
    %v222 = vadd.f32 %v123, 1.0
    %v223 = vlaneseq
    %v224 = vshrl.u32 %v223, 7
    %v225 = vsub.s32 0, %v224
    %v226 = vrot.slane %v222, %v225
    %v227 = vmul.f32 %v220, %v226
    %v228 = vmul.f32 %v221, %v226
    %v229 = vpack.c.bf16 %v228, %v227
    %v230 = vld [vmem:[%s1] sm:$0xff]
    %v231 = vld [vmem:[%s1 + $0x8] sm:$0xf]
    %v232 = vld [vmem:[%s1 + $0xc] sm:$0xff]
    %v233 = vld [vmem:[%s1 + $0x14] sm:$0xf]
    %v234 = vld [vmem:[%s1 + $0x18] sm:$0xff]
    %v235 = vld [vmem:[%s1 + $0x20] sm:$0xf]
    %v236 = vld [vmem:[%s1 + $0x24] sm:$0xff]
    %v237 = vld [vmem:[%s1 + $0x2c] sm:$0xf]
    %v246 = vunpack.c.l.b16 %v230
    %v247 = vunpack.c.h.b16 %v230
    %v248 = vunpack.c.l.b16 %v231
    %v249 = vunpack.c.l.b16 %v232
    %v250 = vunpack.c.h.b16 %v232
    %v251 = vunpack.c.l.b16 %v233
    %v252 = vunpack.c.l.b16 %v234
    %v253 = vunpack.c.h.b16 %v234
    %v254 = vunpack.c.l.b16 %v235
    %v255 = vunpack.c.l.b16 %v236
    %v256 = vunpack.c.h.b16 %v236
    %v257 = vunpack.c.l.b16 %v237
    %v258 = vpack.c.b16 %v249, %v246
    %v259 = vpack.c.b16 %v250, %v247
    %v260 = vpack.c.b16 %v251, %v248
    %v261 = vpack.c.b16 %v255, %v252
    %v262 = vpack.c.b16 %v256, %v253
    %v263 = vpack.c.b16 %v257, %v254
    %v271 = vsel %vm194, %v229, 0
    %273 = vmatprep.subr.bf16.mxu0 %v259
    %274 = vmatpush1.bf16.msra.mxu0 %v258
    %275 = vmatprep.subr.bf16.mxu0 %v262
    %276 = vmatpush1.bf16.msra.mxu0 %v261
    %277 = vmatprep.subr.bf16.mxu0 0
    %278 = vmatpush1.bf16.msra.mxu0 0
    %279 = vmatprep.subr.bf16.mxu0 0
    %280 = vmatpush1.bf16.msra.mxu0 0
    %281 = vmatprep.subr.bf16.mxu0 0
    %282 = vmatpush1.bf16.msra.mxu0 0
    %283 = vmatprep.subr.bf16.mxu0 0
    %284 = vmatpush1.bf16.msra.mxu0 0
    %285 = vmatprep.subr.bf16.mxu0 0
    %286 = vmatpush1.bf16.msra.mxu0 0
    %287 = vmatprep.subr.bf16.mxu0 0
    %288 = vmatpush1.bf16.msra.mxu0 0
    %289 = vmatprep.subr.bf16.mxu0 0
    %290 = vmatpush1.bf16.msra.mxu0 0
    %291 = vmatprep.subr.bf16.mxu0 0
    %292 = vmatpush1.bf16.msra.mxu0 0
    %293 = vmatprep.subr.bf16.mxu0 0
    %294 = vmatpush1.bf16.msra.mxu0 0
    %295 = vmatprep.subr.bf16.mxu0 0
    %296 = vmatpush1.bf16.msra.mxu0 0
    %297 = vmatprep.subr.bf16.mxu0 0
    %298 = vmatpush1.bf16.msra.mxu0 0
    %299 = vmatprep.subr.bf16.mxu0 0
    %300 = vmatpush1.bf16.msra.mxu0 0
    %301 = vmatprep.subr.bf16.mxu0 0
    %302 = vmatpush1.bf16.msra.mxu0 0
    %303 = vmatprep.subr.bf16.mxu0 0
    %304 = vmatpush1.bf16.msra.mxu0 0
    %305 = vmatprep.mubr.bf16.mxu0 0
    %306 = vmatmul.mubr.bf16.gmra.mrb[0].mxu0 %v271
    %v307 = vpop.f32.mrb[0].mxu0
    %v308 = vadd.f32 0.0, %v307
    %v309 = vpop.f32.mrb[0].mxu0
    %v310 = vadd.f32 0.0, %v309
    %v311 = vpop.f32.mrb[0].mxu0
    %v312 = vadd.f32 0.0, %v311
    %v313 = vpop.f32.mrb[0].mxu0
    %v314 = vadd.f32 0.0, %v313
    %315 = vdwg.mxu0
    %316 = vmatprep.subr.bf16.mxu0 0
    %317 = vmatpush1.bf16.msra.mxu0 %v260
    %318 = vmatprep.subr.bf16.mxu0 0
    %319 = vmatpush1.bf16.msra.mxu0 %v263
    %320 = vmatprep.subr.bf16.mxu0 0
    %321 = vmatpush1.bf16.msra.mxu0 0
    %322 = vmatprep.subr.bf16.mxu0 0
    %323 = vmatpush1.bf16.msra.mxu0 0
    %324 = vmatprep.subr.bf16.mxu0 0
    %325 = vmatpush1.bf16.msra.mxu0 0
    %326 = vmatprep.subr.bf16.mxu0 0
    %327 = vmatpush1.bf16.msra.mxu0 0
    %328 = vmatprep.subr.bf16.mxu0 0
    %329 = vmatpush1.bf16.msra.mxu0 0
    %330 = vmatprep.subr.bf16.mxu0 0
    %331 = vmatpush1.bf16.msra.mxu0 0
    %332 = vmatprep.subr.bf16.mxu0 0
    %333 = vmatpush1.bf16.msra.mxu0 0
    %334 = vmatprep.subr.bf16.mxu0 0
    %335 = vmatpush1.bf16.msra.mxu0 0
    %336 = vmatprep.subr.bf16.mxu0 0
    %337 = vmatpush1.bf16.msra.mxu0 0
    %338 = vmatprep.subr.bf16.mxu0 0
    %339 = vmatpush1.bf16.msra.mxu0 0
    %340 = vmatprep.subr.bf16.mxu0 0
    %341 = vmatpush1.bf16.msra.mxu0 0
    %342 = vmatprep.subr.bf16.mxu0 0
    %343 = vmatpush1.bf16.msra.mxu0 0
    %344 = vmatprep.subr.bf16.mxu0 0
    %345 = vmatpush1.bf16.msra.mxu0 0
    %346 = vmatprep.subr.bf16.mxu0 0
    %347 = vmatpush1.bf16.msra.mxu0 0
    %348 = vmatprep.mubr.bf16.mxu0 0
    %349 = vmatmul.mubr.bf16.gmra.mrb[0].mxu0 %v271
    %v350 = vpop.f32.mrb[0].mxu0
    %v351 = vadd.f32 0.0, %v350
    %v352 = vpop.f32.mrb[0].mxu0
    %v353 = vpop.f32.mrb[0].mxu0
    %v354 = vadd.f32 0.0, %v353
    %v355 = vpop.f32.mrb[0].mxu0
    %356 = vdwg.mxu0
    %vm357 = vcmask 130048
    %v359 = vsel %vm357, %v124, 0
    %v362 = vsel %vm357, %v125, 0
    %v365 = vsel %vm357, %v126, 0
    %v368 = vsel %vm357, %v127, 0
    %v371 = vsel %vm357, %v128, 0
    %v374 = vsel %vm357, %v129, 0
    %v377 = vsel %vm357, %v130, 0
    %v380 = vsel %vm357, %v131, 0
    %382 = vmatprep.subr.mxu0 0.0
    %383 = vmatpush1.msra.mxu0 %v308
    %384 = vmatprep.subr.mxu0 0.0
    %385 = vmatpush1.msra.mxu0 %v312
    %386 = vmatprep.subr.mxu0 0.0
    %387 = vmatpush1.msra.mxu0 0.0
    %388 = vmatprep.subr.mxu0 0.0
    %389 = vmatpush1.msra.mxu0 0.0
    %390 = vmatprep.subr.mxu0 0.0
    %391 = vmatpush1.msra.mxu0 0.0
    %392 = vmatprep.subr.mxu0 0.0
    %393 = vmatpush1.msra.mxu0 0.0
    %394 = vmatprep.subr.mxu0 0.0
    %395 = vmatpush1.msra.mxu0 0.0
    %396 = vmatprep.subr.mxu0 0.0
    %397 = vmatpush1.msra.mxu0 0.0
    %398 = vmatprep.subr.mxu0 0.0
    %399 = vmatpush1.msra.mxu0 0.0
    %400 = vmatprep.subr.mxu0 0.0
    %401 = vmatpush1.msra.mxu0 0.0
    %402 = vmatprep.subr.mxu0 0.0
    %403 = vmatpush1.msra.mxu0 0.0
    %404 = vmatprep.subr.mxu0 0.0
    %405 = vmatpush1.msra.mxu0 0.0
    %406 = vmatprep.subr.mxu0 0.0
    %407 = vmatpush1.msra.mxu0 0.0
    %408 = vmatprep.subr.mxu0 0.0
    %409 = vmatpush1.msra.mxu0 0.0
    %410 = vmatprep.subr.mxu0 0.0
    %411 = vmatpush1.msra.mxu0 0.0
    %412 = vmatprep.subr.mxu0 0.0
    %413 = vmatpush1.msra.mxu0 0.0
    %414 = vmatprep.subr.mxu0 0.0
    %415 = vmatpush1.msra.mxu0 0.0
    %416 = vmatprep.subr.mxu0 0.0
    %417 = vmatpush1.msra.mxu0 0.0
    %418 = vmatprep.subr.mxu0 0.0
    %419 = vmatpush1.msra.mxu0 0.0
    %420 = vmatprep.subr.mxu0 0.0
    %421 = vmatpush1.msra.mxu0 0.0
    %422 = vmatprep.subr.mxu0 0.0
    %423 = vmatpush1.msra.mxu0 0.0
    %424 = vmatprep.subr.mxu0 0.0
    %425 = vmatpush1.msra.mxu0 0.0
    %426 = vmatprep.subr.mxu0 0.0
    %427 = vmatpush1.msra.mxu0 0.0
    %428 = vmatprep.subr.mxu0 0.0
    %429 = vmatpush1.msra.mxu0 0.0
    %430 = vmatprep.subr.mxu0 0.0
    %431 = vmatpush1.msra.mxu0 0.0
    %432 = vmatprep.subr.mxu0 0.0
    %433 = vmatpush1.msra.mxu0 0.0
    %434 = vmatprep.subr.mxu0 0.0
    %435 = vmatpush1.msra.mxu0 0.0
    %436 = vmatprep.subr.mxu0 0.0
    %437 = vmatpush1.msra.mxu0 0.0
    %438 = vmatprep.subr.mxu0 0.0
    %439 = vmatpush1.msra.mxu0 0.0
    %440 = vmatprep.subr.mxu0 0.0
    %441 = vmatpush1.msra.mxu0 0.0
    %442 = vmatprep.subr.mxu0 0.0
    %443 = vmatpush1.msra.mxu0 0.0
    %444 = vmatprep.subr.mxu0 0.0
    %445 = vmatpush1.msra.mxu0 0.0
    %446 = vmatprep.mubr.f32.mxu0 0.0
    %447 = vmatmul.mubr.f32.gmra.mrb[0].mxu0 %v359
    %v448 = vpop.f32.mrb[0].mxu0
    %v449 = vadd.f32 0.0, %v448
    %v450 = vpop.f32.mrb[0].mxu0
    %451 = vmatprep.mubr.f32.mxu0 0.0
    %452 = vmatmul.mubr.f32.gmra.mrb[0].mxu0 %v362
    %v453 = vpop.f32.mrb[0].mxu0
    %v454 = vadd.f32 0.0, %v453
    %v455 = vpop.f32.mrb[0].mxu0
    %456 = vmatprep.mubr.f32.mxu0 0.0
    %457 = vmatmul.mubr.f32.gmra.mrb[0].mxu0 %v365
    %v458 = vpop.f32.mrb[0].mxu0
    %v459 = vadd.f32 0.0, %v458
    %v460 = vpop.f32.mrb[0].mxu0
    %461 = vmatprep.mubr.f32.mxu0 0.0
    %462 = vmatmul.mubr.f32.gmra.mrb[0].mxu0 %v368
    %v463 = vpop.f32.mrb[0].mxu0
    %v464 = vadd.f32 0.0, %v463
    %v465 = vpop.f32.mrb[0].mxu0
    %466 = vmatprep.mubr.f32.mxu0 0.0
    %467 = vmatmul.mubr.f32.gmra.mrb[0].mxu0 %v371
    %v468 = vpop.f32.mrb[0].mxu0
    %v469 = vadd.f32 0.0, %v468
    %v470 = vpop.f32.mrb[0].mxu0
    %471 = vmatprep.mubr.f32.mxu0 0.0
    %472 = vmatmul.mubr.f32.gmra.mrb[0].mxu0 %v374
    %v473 = vpop.f32.mrb[0].mxu0
    %v474 = vadd.f32 0.0, %v473
    %v475 = vpop.f32.mrb[0].mxu0
    %476 = vmatprep.mubr.f32.mxu0 0.0
    %477 = vmatmul.mubr.f32.gmra.mrb[0].mxu0 %v377
    %v478 = vpop.f32.mrb[0].mxu0
    %v479 = vadd.f32 0.0, %v478
    %v480 = vpop.f32.mrb[0].mxu0
    %481 = vmatprep.mubr.f32.mxu0 0.0
    %482 = vmatmul.mubr.f32.gmra.mrb[0].mxu0 %v380
    %v483 = vpop.f32.mrb[0].mxu0
    %v484 = vadd.f32 0.0, %v483
    %v485 = vpop.f32.mrb[0].mxu0
    %486 = vdwg.mxu0
    %v487 = vmul.f32 %v449, %v132
    %v488 = vmul.f32 %v454, %v133
    %v489 = vmul.f32 %v459, %v134
    %v490 = vmul.f32 %v464, %v135
    %v491 = vmul.f32 %v469, %v136
    %v492 = vmul.f32 %v474, %v137
    %v493 = vmul.f32 %v479, %v138
    %v494 = vmul.f32 %v484, %v139
    %v495 = vlaneseq
    %v496 = vshrl.u32 %v495, 7
    %v497 = vsub.s32 0, %v496
    %v498 = vrot.slane %v120, %v497
    %vm499 = vcmask 523264
    %v501 = vsel %vm499, %v172, 0
    %v504 = vsel %vm499, %v173, 0
    %506 = vmatprep.subr.mxu0 0.0
    %507 = vmatpush1.msra.mxu0 %v487
    %508 = vmatprep.subr.mxu0 0.0
    %509 = vmatpush1.msra.mxu0 %v488
    %510 = vmatprep.subr.mxu0 0.0
    %511 = vmatpush1.msra.mxu0 %v489
    %512 = vmatprep.subr.mxu0 0.0
    %513 = vmatpush1.msra.mxu0 %v490
    %514 = vmatprep.subr.mxu0 0.0
    %515 = vmatpush1.msra.mxu0 %v491
    %516 = vmatprep.subr.mxu0 0.0
    %517 = vmatpush1.msra.mxu0 %v492
    %518 = vmatprep.subr.mxu0 0.0
    %519 = vmatpush1.msra.mxu0 %v493
    %520 = vmatprep.subr.mxu0 0.0
    %521 = vmatpush1.msra.mxu0 %v494
    %522 = vmatprep.subr.mxu0 0.0
    %523 = vmatpush1.msra.mxu0 0.0
    %524 = vmatprep.subr.mxu0 0.0
    %525 = vmatpush1.msra.mxu0 0.0
    %526 = vmatprep.subr.mxu0 0.0
    %527 = vmatpush1.msra.mxu0 0.0
    %528 = vmatprep.subr.mxu0 0.0
    %529 = vmatpush1.msra.mxu0 0.0
    %530 = vmatprep.subr.mxu0 0.0
    %531 = vmatpush1.msra.mxu0 0.0
    %532 = vmatprep.subr.mxu0 0.0
    %533 = vmatpush1.msra.mxu0 0.0
    %534 = vmatprep.subr.mxu0 0.0
    %535 = vmatpush1.msra.mxu0 0.0
    %536 = vmatprep.subr.mxu0 0.0
    %537 = vmatpush1.msra.mxu0 0.0
    %538 = vmatprep.subr.mxu0 0.0
    %539 = vmatpush1.msra.mxu0 0.0
    %540 = vmatprep.subr.mxu0 0.0
    %541 = vmatpush1.msra.mxu0 0.0
    %542 = vmatprep.subr.mxu0 0.0
    %543 = vmatpush1.msra.mxu0 0.0
    %544 = vmatprep.subr.mxu0 0.0
    %545 = vmatpush1.msra.mxu0 0.0
    %546 = vmatprep.subr.mxu0 0.0
    %547 = vmatpush1.msra.mxu0 0.0
    %548 = vmatprep.subr.mxu0 0.0
    %549 = vmatpush1.msra.mxu0 0.0
    %550 = vmatprep.subr.mxu0 0.0
    %551 = vmatpush1.msra.mxu0 0.0
    %552 = vmatprep.subr.mxu0 0.0
    %553 = vmatpush1.msra.mxu0 0.0
    %554 = vmatprep.subr.mxu0 0.0
    %555 = vmatpush1.msra.mxu0 0.0
    %556 = vmatprep.subr.mxu0 0.0
    %557 = vmatpush1.msra.mxu0 0.0
    %558 = vmatprep.subr.mxu0 0.0
    %559 = vmatpush1.msra.mxu0 0.0
    %560 = vmatprep.subr.mxu0 0.0
    %561 = vmatpush1.msra.mxu0 0.0
    %562 = vmatprep.subr.mxu0 0.0
    %563 = vmatpush1.msra.mxu0 0.0
    %564 = vmatprep.subr.mxu0 0.0
    %565 = vmatpush1.msra.mxu0 0.0
    %566 = vmatprep.subr.mxu0 0.0
    %567 = vmatpush1.msra.mxu0 0.0
    %568 = vmatprep.subr.mxu0 0.0
    %569 = vmatpush1.msra.mxu0 0.0
    %570 = vmatprep.mubr.f32.mxu0 0.0
    %571 = vmatmul.mubr.f32.gmra.mrb[0].mxu0 %v501
    %v572 = vpop.f32.mrb[0].mxu0
    %v573 = vadd.f32 %v498, %v572
    %v574 = vpop.f32.mrb[0].mxu0
    %575 = vmatprep.mubr.f32.mxu0 0.0
    %576 = vmatmul.mubr.f32.gmra.mrb[0].mxu0 %v504
    %v577 = vpop.f32.mrb[0].mxu0
    %v578 = vadd.f32 %v498, %v577
    %v579 = vpop.f32.mrb[0].mxu0
    %580 = vdwg.mxu0
    %v581 = vsub.f32 0.0, %v573
    %v582 = vsub.f32 0.0, %v578
    %v583 = vmul.f32 %v581, 1.442695
    %v584 = vpow.pop %v583
    %v585 = vmul.f32 %v582, 1.442695
    %v586 = vpow.pop %v585
    %v587 = vadd.f32 %v584, 1.0
    %v588 = vadd.f32 %v586, 1.0
    %v589 = vrcp.pop %v587
    %v590 = vmul.f32 1.0, %v589
    %v591 = vrcp.pop %v588
    %v592 = vmul.f32 1.0, %v591
    %v593 = vmul.f32 %v573, %v590
    %v594 = vmul.f32 %v578, %v592
    %v595 = vpack.c.bf16 %v594, %v593
    %v596 = vld [vmem:[#allocation5] sm:$0xff]
    %v597 = vld [vmem:[#allocation5 + $0x8] sm:$0xff]
    %v598 = vld [vmem:[#allocation5 + $0x10] sm:$0xff]
    %v599 = vld [vmem:[#allocation5 + $0x18] sm:$0xff]
    %v600 = vld [vmem:[#allocation5 + $0x20] sm:$0xff]
    %v601 = vld [vmem:[#allocation5 + $0x28] sm:$0xff]
    %v602 = vld [vmem:[#allocation5 + $0x30] sm:$0xff]
    %v603 = vld [vmem:[#allocation5 + $0x38] sm:$0xff]
    %v604 = vld [vmem:[#allocation5 + $0x40] sm:$0xff]
    %v605 = vld [vmem:[#allocation5 + $0x48] sm:$0xff]
    %v606 = vld [vmem:[#allocation5 + $0x50] sm:$0xff]
    %v607 = vld [vmem:[#allocation5 + $0x58] sm:$0xff]
    %v608 = vld [vmem:[#allocation5 + $0x60] sm:$0xff]
    %v609 = vld [vmem:[#allocation5 + $0x68] sm:$0xff]
    %v610 = vld [vmem:[#allocation5 + $0x70] sm:$0xff]
    %v611 = vld [vmem:[#allocation5 + $0x78] sm:$0xff]
    %v628 = vunpack.c.l.b16 %v596
    %v629 = vunpack.c.h.b16 %v596
    %v630 = vunpack.c.l.b16 %v597
    %v631 = vunpack.c.h.b16 %v597
    %v632 = vunpack.c.l.b16 %v598
    %v633 = vunpack.c.h.b16 %v598
    %v634 = vunpack.c.l.b16 %v599
    %v635 = vunpack.c.h.b16 %v599
    %v636 = vunpack.c.l.b16 %v600
    %v637 = vunpack.c.h.b16 %v600
    %v638 = vunpack.c.l.b16 %v601
    %v639 = vunpack.c.h.b16 %v601
    %v640 = vunpack.c.l.b16 %v602
    %v641 = vunpack.c.h.b16 %v602
    %v642 = vunpack.c.l.b16 %v603
    %v643 = vunpack.c.h.b16 %v603
    %v644 = vunpack.c.l.b16 %v604
    %v645 = vunpack.c.h.b16 %v604
    %v646 = vunpack.c.l.b16 %v605
    %v647 = vunpack.c.h.b16 %v605
    %v648 = vunpack.c.l.b16 %v606
    %v649 = vunpack.c.h.b16 %v606
    %v650 = vunpack.c.l.b16 %v607
    %v651 = vunpack.c.h.b16 %v607
    %v652 = vunpack.c.l.b16 %v608
    %v653 = vunpack.c.h.b16 %v608
    %v654 = vunpack.c.l.b16 %v609
    %v655 = vunpack.c.h.b16 %v609
    %v656 = vunpack.c.l.b16 %v610
    %v657 = vunpack.c.h.b16 %v610
    %v658 = vunpack.c.l.b16 %v611
    %v659 = vunpack.c.h.b16 %v611
    %v660 = vpack.c.b16 %v630, %v628
    %v661 = vpack.c.b16 %v631, %v629
    %v662 = vpack.c.b16 %v634, %v632
    %v663 = vpack.c.b16 %v635, %v633
    %v664 = vpack.c.b16 %v638, %v636
    %v665 = vpack.c.b16 %v639, %v637
    %v666 = vpack.c.b16 %v642, %v640
    %v667 = vpack.c.b16 %v643, %v641
    %v668 = vpack.c.b16 %v646, %v644
    %v669 = vpack.c.b16 %v647, %v645
    %v670 = vpack.c.b16 %v650, %v648
    %v671 = vpack.c.b16 %v651, %v649
    %v672 = vpack.c.b16 %v654, %v652
    %v673 = vpack.c.b16 %v655, %v653
    %v674 = vpack.c.b16 %v658, %v656
    %v675 = vpack.c.b16 %v659, %v657
    %692 = vmatprep.subr.bf16.mxu0 %v661
    %693 = vmatpush1.bf16.msra.mxu0 %v660
    %694 = vmatprep.subr.bf16.mxu0 %v663
    %695 = vmatpush1.bf16.msra.mxu0 %v662
    %696 = vmatprep.subr.bf16.mxu0 %v665
    %697 = vmatpush1.bf16.msra.mxu0 %v664
    %698 = vmatprep.subr.bf16.mxu0 %v667
    %699 = vmatpush1.bf16.msra.mxu0 %v666
    %700 = vmatprep.subr.bf16.mxu0 %v669
    %701 = vmatpush1.bf16.msra.mxu0 %v668
    %702 = vmatprep.subr.bf16.mxu0 %v671
    %703 = vmatpush1.bf16.msra.mxu0 %v670
    %704 = vmatprep.subr.bf16.mxu0 %v673
    %705 = vmatpush1.bf16.msra.mxu0 %v672
    %706 = vmatprep.subr.bf16.mxu0 %v675
    %707 = vmatpush1.bf16.msra.mxu0 %v674
    %708 = vmatprep.subr.bf16.mxu0 0
    %709 = vmatpush1.bf16.msra.mxu0 0
    %710 = vmatprep.subr.bf16.mxu0 0
    %711 = vmatpush1.bf16.msra.mxu0 0
    %712 = vmatprep.subr.bf16.mxu0 0
    %713 = vmatpush1.bf16.msra.mxu0 0
    %714 = vmatprep.subr.bf16.mxu0 0
    %715 = vmatpush1.bf16.msra.mxu0 0
    %716 = vmatprep.subr.bf16.mxu0 0
    %717 = vmatpush1.bf16.msra.mxu0 0
    %718 = vmatprep.subr.bf16.mxu0 0
    %719 = vmatpush1.bf16.msra.mxu0 0
    %720 = vmatprep.subr.bf16.mxu0 0
    %721 = vmatpush1.bf16.msra.mxu0 0
    %722 = vmatprep.subr.bf16.mxu0 0
    %723 = vmatpush1.bf16.msra.mxu0 0
    %724 = vmatprep.mubr.bf16.mxu0 0
    %725 = vmatmul.mubr.bf16.gmra.mrb[0].mxu0 %v595
    %v726 = vpop.f32.mrb[0].mxu0
    %v727 = vadd.f32 0.0, %v726
    %v728 = vpop.f32.mrb[0].mxu0
    %v729 = vadd.f32 0.0, %v728
    %v730 = vpop.f32.mrb[0].mxu0
    %v731 = vadd.f32 0.0, %v730
    %v732 = vpop.f32.mrb[0].mxu0
    %v733 = vadd.f32 0.0, %v732
    %734 = vdwg.mxu0
    %v735 = vld [vmem:[#allocation7] sm:$0xff]
    %v736 = vld [vmem:[#allocation7 + $0x8] sm:$0xff]
    %v737 = vld [vmem:[#allocation8] sm:$0xff]
    %v738 = vld [vmem:[#allocation8 + $0x8] sm:$0xff]
    %v739 = vld [vmem:[#allocation8 + $0x10] sm:$0xff]
    %740 = vmatprep.subr.mxu0 %v310
    %741 = vmatpush1.xpose.msra.mxu0 %v308
    %742 = vmatprep.subr.mxu0 %v314
    %743 = vmatpush1.xpose.msra.mxu0 %v312
    %744 = vmatprep.subr.mxu0 0.0
    %745 = vmatpush1.xpose.msra.mxu0 0.0
    %746 = vmatprep.subr.mxu0 0.0
    %747 = vmatpush1.xpose.msra.mxu0 0.0
    %748 = vmatprep.subr.mxu0 0.0
    %749 = vmatpush1.xpose.msra.mxu0 0.0
    %750 = vmatprep.subr.mxu0 0.0
    %751 = vmatpush1.xpose.msra.mxu0 0.0
    %752 = vmatprep.subr.mxu0 0.0
    %753 = vmatpush1.xpose.msra.mxu0 0.0
    %754 = vmatprep.subr.mxu0 0.0
    %755 = vmatpush1.xpose.msra.mxu0 0.0
    %756 = vmatprep.subr.mxu0 0.0
    %757 = vmatpush1.xpose.msra.mxu0 0.0
    %758 = vmatprep.subr.mxu0 0.0
    %759 = vmatpush1.xpose.msra.mxu0 0.0
    %760 = vmatprep.subr.mxu0 0.0
    %761 = vmatpush1.xpose.msra.mxu0 0.0
    %762 = vmatprep.subr.mxu0 0.0
    %763 = vmatpush1.xpose.msra.mxu0 0.0
    %764 = vmatprep.subr.mxu0 0.0
    %765 = vmatpush1.xpose.msra.mxu0 0.0
    %766 = vmatprep.subr.mxu0 0.0
    %767 = vmatpush1.xpose.msra.mxu0 0.0
    %768 = vmatprep.subr.mxu0 0.0
    %769 = vmatpush1.xpose.msra.mxu0 0.0
    %770 = vmatprep.subr.mxu0 0.0
    %771 = vmatpush1.xpose.msra.mxu0 0.0
    %772 = vmatprep.subr.mxu0 0.0
    %773 = vmatpush1.xpose.msra.mxu0 0.0
    %774 = vmatprep.subr.mxu0 0.0
    %775 = vmatpush1.xpose.msra.mxu0 0.0
    %776 = vmatprep.subr.mxu0 0.0
    %777 = vmatpush1.xpose.msra.mxu0 0.0
    %778 = vmatprep.subr.mxu0 0.0
    %779 = vmatpush1.xpose.msra.mxu0 0.0
    %780 = vmatprep.subr.mxu0 0.0
    %781 = vmatpush1.xpose.msra.mxu0 0.0
    %782 = vmatprep.subr.mxu0 0.0
    %783 = vmatpush1.xpose.msra.mxu0 0.0
    %784 = vmatprep.subr.mxu0 0.0
    %785 = vmatpush1.xpose.msra.mxu0 0.0
    %786 = vmatprep.subr.mxu0 0.0
    %787 = vmatpush1.xpose.msra.mxu0 0.0
    %788 = vmatprep.subr.mxu0 0.0
    %789 = vmatpush1.xpose.msra.mxu0 0.0
    %790 = vmatprep.subr.mxu0 0.0
    %791 = vmatpush1.xpose.msra.mxu0 0.0
    %792 = vmatprep.subr.mxu0 0.0
    %793 = vmatpush1.xpose.msra.mxu0 0.0
    %794 = vmatprep.subr.mxu0 0.0
    %795 = vmatpush1.xpose.msra.mxu0 0.0
    %796 = vmatprep.subr.mxu0 0.0
    %797 = vmatpush1.xpose.msra.mxu0 0.0
    %798 = vmatprep.subr.mxu0 0.0
    %799 = vmatpush1.xpose.msra.mxu0 0.0
    %800 = vmatprep.subr.mxu0 0.0
    %801 = vmatpush1.xpose.msra.mxu0 0.0
    %802 = vmatprep.subr.mxu0 0.0
    %803 = vmatpush1.xpose.msra.mxu0 0.0
    %804 = vmatprep.mubr.f32.mxu0 %v738
    %805 = vmatmul.mubr.f32.gmra.mrb[0].mxu0 %v737
    %v806 = vpop.f32.mrb[0].mxu0
    %v807 = vadd.f32 0.0, %v806
    %v808 = vpop.f32.mrb[0].mxu0
    %809 = vdwg.mxu0
    %810 = vmatprep.subr.mxu0 0.0
    %811 = vmatpush1.xpose.msra.mxu0 %v351
    %812 = vmatprep.subr.mxu0 0.0
    %813 = vmatpush1.xpose.msra.mxu0 %v354
    %814 = vmatprep.subr.mxu0 0.0
    %815 = vmatpush1.xpose.msra.mxu0 0.0
    %816 = vmatprep.subr.mxu0 0.0
    %817 = vmatpush1.xpose.msra.mxu0 0.0
    %818 = vmatprep.subr.mxu0 0.0
    %819 = vmatpush1.xpose.msra.mxu0 0.0
    %820 = vmatprep.subr.mxu0 0.0
    %821 = vmatpush1.xpose.msra.mxu0 0.0
    %822 = vmatprep.subr.mxu0 0.0
    %823 = vmatpush1.xpose.msra.mxu0 0.0
    %824 = vmatprep.subr.mxu0 0.0
    %825 = vmatpush1.xpose.msra.mxu0 0.0
    %826 = vmatprep.subr.mxu0 0.0
    %827 = vmatpush1.xpose.msra.mxu0 0.0
    %828 = vmatprep.subr.mxu0 0.0
    %829 = vmatpush1.xpose.msra.mxu0 0.0
    %830 = vmatprep.subr.mxu0 0.0
    %831 = vmatpush1.xpose.msra.mxu0 0.0
    %832 = vmatprep.subr.mxu0 0.0
    %833 = vmatpush1.xpose.msra.mxu0 0.0
    %834 = vmatprep.subr.mxu0 0.0
    %835 = vmatpush1.xpose.msra.mxu0 0.0
    %836 = vmatprep.subr.mxu0 0.0
    %837 = vmatpush1.xpose.msra.mxu0 0.0
    %838 = vmatprep.subr.mxu0 0.0
    %839 = vmatpush1.xpose.msra.mxu0 0.0
    %840 = vmatprep.subr.mxu0 0.0
    %841 = vmatpush1.xpose.msra.mxu0 0.0
    %842 = vmatprep.subr.mxu0 0.0
    %843 = vmatpush1.xpose.msra.mxu0 0.0
    %844 = vmatprep.subr.mxu0 0.0
    %845 = vmatpush1.xpose.msra.mxu0 0.0
    %846 = vmatprep.subr.mxu0 0.0
    %847 = vmatpush1.xpose.msra.mxu0 0.0
    %848 = vmatprep.subr.mxu0 0.0
    %849 = vmatpush1.xpose.msra.mxu0 0.0
    %850 = vmatprep.subr.mxu0 0.0
    %851 = vmatpush1.xpose.msra.mxu0 0.0
    %852 = vmatprep.subr.mxu0 0.0
    %853 = vmatpush1.xpose.msra.mxu0 0.0
    %854 = vmatprep.subr.mxu0 0.0
    %855 = vmatpush1.xpose.msra.mxu0 0.0
    %856 = vmatprep.subr.mxu0 0.0
    %857 = vmatpush1.xpose.msra.mxu0 0.0
    %858 = vmatprep.subr.mxu0 0.0
    %859 = vmatpush1.xpose.msra.mxu0 0.0
    %860 = vmatprep.subr.mxu0 0.0
    %861 = vmatpush1.xpose.msra.mxu0 0.0
    %862 = vmatprep.subr.mxu0 0.0
    %863 = vmatpush1.xpose.msra.mxu0 0.0
    %864 = vmatprep.subr.mxu0 0.0
    %865 = vmatpush1.xpose.msra.mxu0 0.0
    %866 = vmatprep.subr.mxu0 0.0
    %867 = vmatpush1.xpose.msra.mxu0 0.0
    %868 = vmatprep.subr.mxu0 0.0
    %869 = vmatpush1.xpose.msra.mxu0 0.0
    %870 = vmatprep.subr.mxu0 0.0
    %871 = vmatpush1.xpose.msra.mxu0 0.0
    %872 = vmatprep.subr.mxu0 0.0
    %873 = vmatpush1.xpose.msra.mxu0 0.0
    %874 = vmatprep.mubr.f32.mxu0 0.0
    %875 = vmatmul.mubr.f32.gmra.mrb[0].mxu0 %v739
    %v876 = vpop.f32.mrb[0].mxu0
    %v877 = vadd.f32 %v807, %v876
    %v878 = vpop.f32.mrb[0].mxu0
    %879 = vdwg.mxu0
    %880 = vmatprep.subr.mxu0 %v729
    %881 = vmatpush1.xpose.msra.mxu0 %v727
    %882 = vmatprep.subr.mxu0 %v733
    %883 = vmatpush1.xpose.msra.mxu0 %v731
    %884 = vmatprep.subr.mxu0 0.0
    %885 = vmatpush1.xpose.msra.mxu0 0.0
    %886 = vmatprep.subr.mxu0 0.0
    %887 = vmatpush1.xpose.msra.mxu0 0.0
    %888 = vmatprep.subr.mxu0 0.0
    %889 = vmatpush1.xpose.msra.mxu0 0.0
    %890 = vmatprep.subr.mxu0 0.0
    %891 = vmatpush1.xpose.msra.mxu0 0.0
    %892 = vmatprep.subr.mxu0 0.0
    %893 = vmatpush1.xpose.msra.mxu0 0.0
    %894 = vmatprep.subr.mxu0 0.0
    %895 = vmatpush1.xpose.msra.mxu0 0.0
    %896 = vmatprep.subr.mxu0 0.0
    %897 = vmatpush1.xpose.msra.mxu0 0.0
    %898 = vmatprep.subr.mxu0 0.0
    %899 = vmatpush1.xpose.msra.mxu0 0.0
    %900 = vmatprep.subr.mxu0 0.0
    %901 = vmatpush1.xpose.msra.mxu0 0.0
    %902 = vmatprep.subr.mxu0 0.0
    %903 = vmatpush1.xpose.msra.mxu0 0.0
    %904 = vmatprep.subr.mxu0 0.0
    %905 = vmatpush1.xpose.msra.mxu0 0.0
    %906 = vmatprep.subr.mxu0 0.0
    %907 = vmatpush1.xpose.msra.mxu0 0.0
    %908 = vmatprep.subr.mxu0 0.0
    %909 = vmatpush1.xpose.msra.mxu0 0.0
    %910 = vmatprep.subr.mxu0 0.0
    %911 = vmatpush1.xpose.msra.mxu0 0.0
    %912 = vmatprep.subr.mxu0 0.0
    %913 = vmatpush1.xpose.msra.mxu0 0.0
    %914 = vmatprep.subr.mxu0 0.0
    %915 = vmatpush1.xpose.msra.mxu0 0.0
    %916 = vmatprep.subr.mxu0 0.0
    %917 = vmatpush1.xpose.msra.mxu0 0.0
    %918 = vmatprep.subr.mxu0 0.0
    %919 = vmatpush1.xpose.msra.mxu0 0.0
    %920 = vmatprep.subr.mxu0 0.0
    %921 = vmatpush1.xpose.msra.mxu0 0.0
    %922 = vmatprep.subr.mxu0 0.0
    %923 = vmatpush1.xpose.msra.mxu0 0.0
    %924 = vmatprep.subr.mxu0 0.0
    %925 = vmatpush1.xpose.msra.mxu0 0.0
    %926 = vmatprep.subr.mxu0 0.0
    %927 = vmatpush1.xpose.msra.mxu0 0.0
    %928 = vmatprep.subr.mxu0 0.0
    %929 = vmatpush1.xpose.msra.mxu0 0.0
    %930 = vmatprep.subr.mxu0 0.0
    %931 = vmatpush1.xpose.msra.mxu0 0.0
    %932 = vmatprep.subr.mxu0 0.0
    %933 = vmatpush1.xpose.msra.mxu0 0.0
    %934 = vmatprep.subr.mxu0 0.0
    %935 = vmatpush1.xpose.msra.mxu0 0.0
    %936 = vmatprep.subr.mxu0 0.0
    %937 = vmatpush1.xpose.msra.mxu0 0.0
    %938 = vmatprep.subr.mxu0 0.0
    %939 = vmatpush1.xpose.msra.mxu0 0.0
    %940 = vmatprep.subr.mxu0 0.0
    %941 = vmatpush1.xpose.msra.mxu0 0.0
    %942 = vmatprep.subr.mxu0 0.0
    %943 = vmatpush1.xpose.msra.mxu0 0.0
    %944 = vmatprep.mubr.f32.mxu0 %v736
    %945 = vmatmul.mubr.f32.gmra.mrb[0].mxu0 %v735
    %v946 = vpop.f32.mrb[0].mxu0
    %v947 = vadd.f32 %v877, %v946
    %v948 = vpop.f32.mrb[0].mxu0
    %949 = vdwg.mxu0
    %v950 = vld [vmem:[%s5] sm:$0xff]
    %952 = vset.pattern.permute.xlu0 0
    %953 = vperm.xlu0 %952, %v950
    %v954 = vpop.permute.xlu0 %953
    %v956 = vadd.f32 %v947, %v954
    %v957 = vmin.f32 %v956, 0.0
    %v958 = vand.u32 2147483647, %v956
    %v959 = vsub.f32 0.0, %v958
    %v960 = vmul.f32 %v959, 1.442695
    %v961 = vpow.pop %v960
    %v962 = vadd.f32 %v961, 1.0
    %v963 = vlog2.pop %v962
    %v964 = vmul.f32 %v963, 0.6931472
    %v965 = vsub.f32 %v957, %v964
    %v967 = vrot.slane %v965, 4
    %v968 = vsel %vm357, %v967, 0
    %v971 = vsel %vm357, %v176, 0
    %v974 = vsel %vm357, %v177, 0
    %976 = vmatprep.subr.mxu0 0.0
    %977 = vmatpush1.xpose.msra.mxu0 %v971
    %978 = vmatprep.subr.mxu0 0.0
    %979 = vmatpush1.xpose.msra.mxu0 %v974
    %980 = vmatprep.subr.mxu0 0.0
    %981 = vmatpush1.xpose.msra.mxu0 0.0
    %982 = vmatprep.subr.mxu0 0.0
    %983 = vmatpush1.xpose.msra.mxu0 0.0
    %984 = vmatprep.subr.mxu0 0.0
    %985 = vmatpush1.xpose.msra.mxu0 0.0
    %986 = vmatprep.subr.mxu0 0.0
    %987 = vmatpush1.xpose.msra.mxu0 0.0
    %988 = vmatprep.subr.mxu0 0.0
    %989 = vmatpush1.xpose.msra.mxu0 0.0
    %990 = vmatprep.subr.mxu0 0.0
    %991 = vmatpush1.xpose.msra.mxu0 0.0
    %992 = vmatprep.subr.mxu0 0.0
    %993 = vmatpush1.xpose.msra.mxu0 0.0
    %994 = vmatprep.subr.mxu0 0.0
    %995 = vmatpush1.xpose.msra.mxu0 0.0
    %996 = vmatprep.subr.mxu0 0.0
    %997 = vmatpush1.xpose.msra.mxu0 0.0
    %998 = vmatprep.subr.mxu0 0.0
    %999 = vmatpush1.xpose.msra.mxu0 0.0
    %1000 = vmatprep.subr.mxu0 0.0
    %1001 = vmatpush1.xpose.msra.mxu0 0.0
    %1002 = vmatprep.subr.mxu0 0.0
    %1003 = vmatpush1.xpose.msra.mxu0 0.0
    %1004 = vmatprep.subr.mxu0 0.0
    %1005 = vmatpush1.xpose.msra.mxu0 0.0
    %1006 = vmatprep.subr.mxu0 0.0
    %1007 = vmatpush1.xpose.msra.mxu0 0.0
    %1008 = vmatprep.subr.mxu0 0.0
    %1009 = vmatpush1.xpose.msra.mxu0 0.0
    %1010 = vmatprep.subr.mxu0 0.0
    %1011 = vmatpush1.xpose.msra.mxu0 0.0
    %1012 = vmatprep.subr.mxu0 0.0
    %1013 = vmatpush1.xpose.msra.mxu0 0.0
    %1014 = vmatprep.subr.mxu0 0.0
    %1015 = vmatpush1.xpose.msra.mxu0 0.0
    %1016 = vmatprep.subr.mxu0 0.0
    %1017 = vmatpush1.xpose.msra.mxu0 0.0
    %1018 = vmatprep.subr.mxu0 0.0
    %1019 = vmatpush1.xpose.msra.mxu0 0.0
    %1020 = vmatprep.subr.mxu0 0.0
    %1021 = vmatpush1.xpose.msra.mxu0 0.0
    %1022 = vmatprep.subr.mxu0 0.0
    %1023 = vmatpush1.xpose.msra.mxu0 0.0
    %1024 = vmatprep.subr.mxu0 0.0
    %1025 = vmatpush1.xpose.msra.mxu0 0.0
    %1026 = vmatprep.subr.mxu0 0.0
    %1027 = vmatpush1.xpose.msra.mxu0 0.0
    %1028 = vmatprep.subr.mxu0 0.0
    %1029 = vmatpush1.xpose.msra.mxu0 0.0
    %1030 = vmatprep.subr.mxu0 0.0
    %1031 = vmatpush1.xpose.msra.mxu0 0.0
    %1032 = vmatprep.subr.mxu0 0.0
    %1033 = vmatpush1.xpose.msra.mxu0 0.0
    %1034 = vmatprep.subr.mxu0 0.0
    %1035 = vmatpush1.xpose.msra.mxu0 0.0
    %1036 = vmatprep.subr.mxu0 0.0
    %1037 = vmatpush1.xpose.msra.mxu0 0.0
    %1038 = vmatprep.subr.mxu0 0.0
    %1039 = vmatpush1.xpose.msra.mxu0 0.0
    %1040 = vmatprep.mubr.f32.mxu0 0.0
    %1041 = vmatmul.mubr.f32.gmra.mrb[0].mxu0 %v968
    %v1042 = vpop.f32.mrb[0].mxu0
    %v1043 = vadd.f32 0.0, %v1042
    %v1044 = vpop.f32.mrb[0].mxu0
    %1045 = vdwg.mxu0
    %v1046 = vsub.f32 %v956, %v1043
    %vm1047 = vcmask 31744
    %v1049 = vsel %vm1047, %v140, 0
    %v1052 = vsel %vm1047, %v141, 0
    %v1055 = vsel %vm1047, %v142, 0
    %v1058 = vsel %vm1047, %v143, 0
    %v1061 = vsel %vm1047, %v144, 0
    %v1064 = vsel %vm1047, %v145, 0
    %v1067 = vsel %vm1047, %v146, 0
    %v1070 = vsel %vm1047, %v147, 0
    %vm1072 = vcmask 1043456
    %v1074 = vsel %vm1072, %v1046, 0
    %1076 = vmatprep.subr.mxu0 0.0
    %1077 = vmatpush1.msra.mxu0 %v1074
    %1078 = vmatprep.subr.mxu0 0.0
    %1079 = vmatpush1.msra.mxu0 0.0
    %1080 = vmatprep.subr.mxu0 0.0
    %1081 = vmatpush1.msra.mxu0 0.0
    %1082 = vmatprep.subr.mxu0 0.0
    %1083 = vmatpush1.msra.mxu0 0.0
    %1084 = vmatprep.subr.mxu0 0.0
    %1085 = vmatpush1.msra.mxu0 0.0
    %1086 = vmatprep.subr.mxu0 0.0
    %1087 = vmatpush1.msra.mxu0 0.0
    %1088 = vmatprep.subr.mxu0 0.0
    %1089 = vmatpush1.msra.mxu0 0.0
    %1090 = vmatprep.subr.mxu0 0.0
    %1091 = vmatpush1.msra.mxu0 0.0
    %1092 = vmatprep.subr.mxu0 0.0
    %1093 = vmatpush1.msra.mxu0 0.0
    %1094 = vmatprep.subr.mxu0 0.0
    %1095 = vmatpush1.msra.mxu0 0.0
    %1096 = vmatprep.subr.mxu0 0.0
    %1097 = vmatpush1.msra.mxu0 0.0
    %1098 = vmatprep.subr.mxu0 0.0
    %1099 = vmatpush1.msra.mxu0 0.0
    %1100 = vmatprep.subr.mxu0 0.0
    %1101 = vmatpush1.msra.mxu0 0.0
    %1102 = vmatprep.subr.mxu0 0.0
    %1103 = vmatpush1.msra.mxu0 0.0
    %1104 = vmatprep.subr.mxu0 0.0
    %1105 = vmatpush1.msra.mxu0 0.0
    %1106 = vmatprep.subr.mxu0 0.0
    %1107 = vmatpush1.msra.mxu0 0.0
    %1108 = vmatprep.subr.mxu0 0.0
    %1109 = vmatpush1.msra.mxu0 0.0
    %1110 = vmatprep.subr.mxu0 0.0
    %1111 = vmatpush1.msra.mxu0 0.0
    %1112 = vmatprep.subr.mxu0 0.0
    %1113 = vmatpush1.msra.mxu0 0.0
    %1114 = vmatprep.subr.mxu0 0.0
    %1115 = vmatpush1.msra.mxu0 0.0
    %1116 = vmatprep.subr.mxu0 0.0
    %1117 = vmatpush1.msra.mxu0 0.0
    %1118 = vmatprep.subr.mxu0 0.0
    %1119 = vmatpush1.msra.mxu0 0.0
    %1120 = vmatprep.subr.mxu0 0.0
    %1121 = vmatpush1.msra.mxu0 0.0
    %1122 = vmatprep.subr.mxu0 0.0
    %1123 = vmatpush1.msra.mxu0 0.0
    %1124 = vmatprep.subr.mxu0 0.0
    %1125 = vmatpush1.msra.mxu0 0.0
    %1126 = vmatprep.subr.mxu0 0.0
    %1127 = vmatpush1.msra.mxu0 0.0
    %1128 = vmatprep.subr.mxu0 0.0
    %1129 = vmatpush1.msra.mxu0 0.0
    %1130 = vmatprep.subr.mxu0 0.0
    %1131 = vmatpush1.msra.mxu0 0.0
    %1132 = vmatprep.subr.mxu0 0.0
    %1133 = vmatpush1.msra.mxu0 0.0
    %1134 = vmatprep.subr.mxu0 0.0
    %1135 = vmatpush1.msra.mxu0 0.0
    %1136 = vmatprep.subr.mxu0 0.0
    %1137 = vmatpush1.msra.mxu0 0.0
    %1138 = vmatprep.subr.mxu0 0.0
    %1139 = vmatpush1.msra.mxu0 0.0
    %1140 = vmatprep.mubr.f32.mxu0 0.0
    %1141 = vmatmul.mubr.f32.gmra.mrb[0].mxu0 %v1049
    %v1142 = vpop.f32.mrb[0].mxu0
    %v1143 = vadd.f32 0.0, %v1142
    %v1144 = vpop.f32.mrb[0].mxu0
    %1145 = vmatprep.mubr.f32.mxu0 0.0
    %1146 = vmatmul.mubr.f32.gmra.mrb[0].mxu0 %v1052
    %v1147 = vpop.f32.mrb[0].mxu0
    %v1148 = vadd.f32 0.0, %v1147
    %v1149 = vpop.f32.mrb[0].mxu0
    %1150 = vmatprep.mubr.f32.mxu0 0.0
    %1151 = vmatmul.mubr.f32.gmra.mrb[0].mxu0 %v1055
    %v1152 = vpop.f32.mrb[0].mxu0
    %v1153 = vadd.f32 0.0, %v1152
    %v1154 = vpop.f32.mrb[0].mxu0
    %1155 = vmatprep.mubr.f32.mxu0 0.0
    %1156 = vmatmul.mubr.f32.gmra.mrb[0].mxu0 %v1058
    %v1157 = vpop.f32.mrb[0].mxu0
    %v1158 = vadd.f32 0.0, %v1157
    %v1159 = vpop.f32.mrb[0].mxu0
    %1160 = vmatprep.mubr.f32.mxu0 0.0
    %1161 = vmatmul.mubr.f32.gmra.mrb[0].mxu0 %v1061
    %v1162 = vpop.f32.mrb[0].mxu0
    %v1163 = vadd.f32 0.0, %v1162
    %v1164 = vpop.f32.mrb[0].mxu0
    %1165 = vmatprep.mubr.f32.mxu0 0.0
    %1166 = vmatmul.mubr.f32.gmra.mrb[0].mxu0 %v1064
    %v1167 = vpop.f32.mrb[0].mxu0
    %v1168 = vadd.f32 0.0, %v1167
    %v1169 = vpop.f32.mrb[0].mxu0
    %1170 = vmatprep.mubr.f32.mxu0 0.0
    %1171 = vmatmul.mubr.f32.gmra.mrb[0].mxu0 %v1067
    %v1172 = vpop.f32.mrb[0].mxu0
    %v1173 = vadd.f32 0.0, %v1172
    %v1174 = vpop.f32.mrb[0].mxu0
    %1175 = vmatprep.mubr.f32.mxu0 0.0
    %1176 = vmatmul.mubr.f32.gmra.mrb[0].mxu0 %v1070
    %v1177 = vpop.f32.mrb[0].mxu0
    %v1178 = vadd.f32 0.0, %v1177
    %v1179 = vpop.f32.mrb[0].mxu0
    %1180 = vdwg.mxu0
    %v1182 = vsel %vm1072, %v1043, 0
    %1184 = vmatprep.subr.mxu0 0.0
    %1185 = vmatpush1.msra.mxu0 %v1182
    %1186 = vmatprep.subr.mxu0 0.0
    %1187 = vmatpush1.msra.mxu0 0.0
    %1188 = vmatprep.subr.mxu0 0.0
    %1189 = vmatpush1.msra.mxu0 0.0
    %1190 = vmatprep.subr.mxu0 0.0
    %1191 = vmatpush1.msra.mxu0 0.0
    %1192 = vmatprep.subr.mxu0 0.0
    %1193 = vmatpush1.msra.mxu0 0.0
    %1194 = vmatprep.subr.mxu0 0.0
    %1195 = vmatpush1.msra.mxu0 0.0
    %1196 = vmatprep.subr.mxu0 0.0
    %1197 = vmatpush1.msra.mxu0 0.0
    %1198 = vmatprep.subr.mxu0 0.0
    %1199 = vmatpush1.msra.mxu0 0.0
    %1200 = vmatprep.subr.mxu0 0.0
    %1201 = vmatpush1.msra.mxu0 0.0
    %1202 = vmatprep.subr.mxu0 0.0
    %1203 = vmatpush1.msra.mxu0 0.0
    %1204 = vmatprep.subr.mxu0 0.0
    %1205 = vmatpush1.msra.mxu0 0.0
    %1206 = vmatprep.subr.mxu0 0.0
    %1207 = vmatpush1.msra.mxu0 0.0
    %1208 = vmatprep.subr.mxu0 0.0
    %1209 = vmatpush1.msra.mxu0 0.0
    %1210 = vmatprep.subr.mxu0 0.0
    %1211 = vmatpush1.msra.mxu0 0.0
    %1212 = vmatprep.subr.mxu0 0.0
    %1213 = vmatpush1.msra.mxu0 0.0
    %1214 = vmatprep.subr.mxu0 0.0
    %1215 = vmatpush1.msra.mxu0 0.0
    %1216 = vmatprep.subr.mxu0 0.0
    %1217 = vmatpush1.msra.mxu0 0.0
    %1218 = vmatprep.subr.mxu0 0.0
    %1219 = vmatpush1.msra.mxu0 0.0
    %1220 = vmatprep.subr.mxu0 0.0
    %1221 = vmatpush1.msra.mxu0 0.0
    %1222 = vmatprep.subr.mxu0 0.0
    %1223 = vmatpush1.msra.mxu0 0.0
    %1224 = vmatprep.subr.mxu0 0.0
    %1225 = vmatpush1.msra.mxu0 0.0
    %1226 = vmatprep.subr.mxu0 0.0
    %1227 = vmatpush1.msra.mxu0 0.0
    %1228 = vmatprep.subr.mxu0 0.0
    %1229 = vmatpush1.msra.mxu0 0.0
    %1230 = vmatprep.subr.mxu0 0.0
    %1231 = vmatpush1.msra.mxu0 0.0
    %1232 = vmatprep.subr.mxu0 0.0
    %1233 = vmatpush1.msra.mxu0 0.0
    %1234 = vmatprep.subr.mxu0 0.0
    %1235 = vmatpush1.msra.mxu0 0.0
    %1236 = vmatprep.subr.mxu0 0.0
    %1237 = vmatpush1.msra.mxu0 0.0
    %1238 = vmatprep.subr.mxu0 0.0
    %1239 = vmatpush1.msra.mxu0 0.0
    %1240 = vmatprep.subr.mxu0 0.0
    %1241 = vmatpush1.msra.mxu0 0.0
    %1242 = vmatprep.subr.mxu0 0.0
    %1243 = vmatpush1.msra.mxu0 0.0
    %1244 = vmatprep.subr.mxu0 0.0
    %1245 = vmatpush1.msra.mxu0 0.0
    %1246 = vmatprep.subr.mxu0 0.0
    %1247 = vmatpush1.msra.mxu0 0.0
    %1248 = vmatprep.mubr.f32.mxu0 0.0
    %1249 = vmatmul.mubr.f32.gmra.mrb[0].mxu0 %v1049
    %v1250 = vpop.f32.mrb[0].mxu0
    %v1251 = vadd.f32 0.0, %v1250
    %v1252 = vpop.f32.mrb[0].mxu0
    %1253 = vmatprep.mubr.f32.mxu0 0.0
    %1254 = vmatmul.mubr.f32.gmra.mrb[0].mxu0 %v1052
    %v1255 = vpop.f32.mrb[0].mxu0
    %v1256 = vadd.f32 0.0, %v1255
    %v1257 = vpop.f32.mrb[0].mxu0
    %1258 = vmatprep.mubr.f32.mxu0 0.0
    %1259 = vmatmul.mubr.f32.gmra.mrb[0].mxu0 %v1055
    %v1260 = vpop.f32.mrb[0].mxu0
    %v1261 = vadd.f32 0.0, %v1260
    %v1262 = vpop.f32.mrb[0].mxu0
    %1263 = vmatprep.mubr.f32.mxu0 0.0
    %1264 = vmatmul.mubr.f32.gmra.mrb[0].mxu0 %v1058
    %v1265 = vpop.f32.mrb[0].mxu0
    %v1266 = vadd.f32 0.0, %v1265
    %v1267 = vpop.f32.mrb[0].mxu0
    %1268 = vmatprep.mubr.f32.mxu0 0.0
    %1269 = vmatmul.mubr.f32.gmra.mrb[0].mxu0 %v1061
    %v1270 = vpop.f32.mrb[0].mxu0
    %v1271 = vadd.f32 0.0, %v1270
    %v1272 = vpop.f32.mrb[0].mxu0
    %1273 = vmatprep.mubr.f32.mxu0 0.0
    %1274 = vmatmul.mubr.f32.gmra.mrb[0].mxu0 %v1064
    %v1275 = vpop.f32.mrb[0].mxu0
    %v1276 = vadd.f32 0.0, %v1275
    %v1277 = vpop.f32.mrb[0].mxu0
    %1278 = vmatprep.mubr.f32.mxu0 0.0
    %1279 = vmatmul.mubr.f32.gmra.mrb[0].mxu0 %v1067
    %v1280 = vpop.f32.mrb[0].mxu0
    %v1281 = vadd.f32 0.0, %v1280
    %v1282 = vpop.f32.mrb[0].mxu0
    %1283 = vmatprep.mubr.f32.mxu0 0.0
    %1284 = vmatmul.mubr.f32.gmra.mrb[0].mxu0 %v1070
    %v1285 = vpop.f32.mrb[0].mxu0
    %v1286 = vadd.f32 0.0, %v1285
    %v1287 = vpop.f32.mrb[0].mxu0
    %1288 = vdwg.mxu0
    %v1289 = vmul.f32 %v1251, %v124
    %v1290 = vmul.f32 %v1256, %v125
    %v1291 = vmul.f32 %v1261, %v126
    %v1292 = vmul.f32 %v1266, %v127
    %v1293 = vmul.f32 %v1271, %v128
    %v1294 = vmul.f32 %v1276, %v129
    %v1295 = vmul.f32 %v1281, %v130
    %v1296 = vmul.f32 %v1286, %v131
    %v1297 = vsel %vm357, %v1289, 0.0
    %1298 = vadd.xlane.f32.xlu0 %v1297
    %v1299 = vpop.xlane.xlu0 %1298
    %v1300 = vsel %vm357, %v1290, 0.0
    %1301 = vadd.xlane.f32.xlu0 %v1300
    %v1302 = vpop.xlane.xlu0 %1301
    %v1303 = vsel %vm357, %v1291, 0.0
    %1304 = vadd.xlane.f32.xlu0 %v1303
    %v1305 = vpop.xlane.xlu0 %1304
    %v1306 = vsel %vm357, %v1292, 0.0
    %1307 = vadd.xlane.f32.xlu0 %v1306
    %v1308 = vpop.xlane.xlu0 %1307
    %v1309 = vsel %vm357, %v1293, 0.0
    %1310 = vadd.xlane.f32.xlu0 %v1309
    %v1311 = vpop.xlane.xlu0 %1310
    %v1312 = vsel %vm357, %v1294, 0.0
    %1313 = vadd.xlane.f32.xlu0 %v1312
    %v1314 = vpop.xlane.xlu0 %1313
    %v1315 = vsel %vm357, %v1295, 0.0
    %1316 = vadd.xlane.f32.xlu0 %v1315
    %v1317 = vpop.xlane.xlu0 %1316
    %v1318 = vsel %vm357, %v1296, 0.0
    %1319 = vadd.xlane.f32.xlu0 %v1318
    %v1320 = vpop.xlane.xlu0 %1319
    %v1321 = vadd.f32 %v1299, %v1143
    %v1322 = vadd.f32 %v1302, %v1148
    %v1323 = vadd.f32 %v1305, %v1153
    %v1324 = vadd.f32 %v1308, %v1158
    %v1325 = vadd.f32 %v1311, %v1163
    %v1326 = vadd.f32 %v1314, %v1168
    %v1327 = vadd.f32 %v1317, %v1173
    %v1328 = vadd.f32 %v1320, %v1178
    %v1329 = vadd.f32 %v1321, %v148
    %v1330 = vadd.f32 %v1322, %v149
    %v1331 = vadd.f32 %v1323, %v150
    %v1332 = vadd.f32 %v1324, %v151
    %v1333 = vadd.f32 %v1325, %v152
    %v1334 = vadd.f32 %v1326, %v153
    %v1335 = vadd.f32 %v1327, %v154
    %v1336 = vadd.f32 %v1328, %v155
    %v1337 = vsel %vm357, %v1329, -inf
    %1338 = vmax.xlane.f32.xlu0 %v1337
    %v1339 = vpop.xlane.xlu0 %1338
    %v1340 = vsel %vm357, %v1330, -inf
    %1341 = vmax.xlane.f32.xlu0 %v1340
    %v1342 = vpop.xlane.xlu0 %1341
    %v1343 = vsel %vm357, %v1331, -inf
    %1344 = vmax.xlane.f32.xlu0 %v1343
    %v1345 = vpop.xlane.xlu0 %1344
    %v1346 = vsel %vm357, %v1332, -inf
    %1347 = vmax.xlane.f32.xlu0 %v1346
    %v1348 = vpop.xlane.xlu0 %1347
    %v1349 = vsel %vm357, %v1333, -inf
    %1350 = vmax.xlane.f32.xlu0 %v1349
    %v1351 = vpop.xlane.xlu0 %1350
    %v1352 = vsel %vm357, %v1334, -inf
    %1353 = vmax.xlane.f32.xlu0 %v1352
    %v1354 = vpop.xlane.xlu0 %1353
    %v1355 = vsel %vm357, %v1335, -inf
    %1356 = vmax.xlane.f32.xlu0 %v1355
    %v1357 = vpop.xlane.xlu0 %1356
    %v1358 = vsel %vm357, %v1336, -inf
    %1359 = vmax.xlane.f32.xlu0 %v1358
    %v1360 = vpop.xlane.xlu0 %1359
    %v1361 = vsub.f32 %v1329, %v1339
    %v1362 = vsub.f32 %v1330, %v1342
    %v1363 = vsub.f32 %v1331, %v1345
    %v1364 = vsub.f32 %v1332, %v1348
    %v1365 = vsub.f32 %v1333, %v1351
    %v1366 = vsub.f32 %v1334, %v1354
    %v1367 = vsub.f32 %v1335, %v1357
    %v1368 = vsub.f32 %v1336, %v1360
    %v1369 = vmul.f32 %v1361, 1.442695
    %v1370 = vpow.pop %v1369
    %v1371 = vmul.f32 %v1362, 1.442695
    %v1372 = vpow.pop %v1371
    %v1373 = vmul.f32 %v1363, 1.442695
    %v1374 = vpow.pop %v1373
    %v1375 = vmul.f32 %v1364, 1.442695
    %v1376 = vpow.pop %v1375
    %v1377 = vmul.f32 %v1365, 1.442695
    %v1378 = vpow.pop %v1377
    %v1379 = vmul.f32 %v1366, 1.442695
    %v1380 = vpow.pop %v1379
    %v1381 = vmul.f32 %v1367, 1.442695
    %v1382 = vpow.pop %v1381
    %v1383 = vmul.f32 %v1368, 1.442695
    %v1384 = vpow.pop %v1383
    %1385 = vmatprep.subr.mxu0 0.0
    %1386 = vmatpush1.msra.mxu0 %v727
    %1387 = vmatprep.subr.mxu0 0.0
    %1388 = vmatpush1.msra.mxu0 %v731
    %1389 = vmatprep.subr.mxu0 0.0
    %1390 = vmatpush1.msra.mxu0 0.0
    %1391 = vmatprep.subr.mxu0 0.0
    %1392 = vmatpush1.msra.mxu0 0.0
    %1393 = vmatprep.subr.mxu0 0.0
    %1394 = vmatpush1.msra.mxu0 0.0
    %1395 = vmatprep.subr.mxu0 0.0
    %1396 = vmatpush1.msra.mxu0 0.0
    %1397 = vmatprep.subr.mxu0 0.0
    %1398 = vmatpush1.msra.mxu0 0.0
    %1399 = vmatprep.subr.mxu0 0.0
    %1400 = vmatpush1.msra.mxu0 0.0
    %1401 = vmatprep.subr.mxu0 0.0
    %1402 = vmatpush1.msra.mxu0 0.0
    %1403 = vmatprep.subr.mxu0 0.0
    %1404 = vmatpush1.msra.mxu0 0.0
    %1405 = vmatprep.subr.mxu0 0.0
    %1406 = vmatpush1.msra.mxu0 0.0
    %1407 = vmatprep.subr.mxu0 0.0
    %1408 = vmatpush1.msra.mxu0 0.0
    %1409 = vmatprep.subr.mxu0 0.0
    %1410 = vmatpush1.msra.mxu0 0.0
    %1411 = vmatprep.subr.mxu0 0.0
    %1412 = vmatpush1.msra.mxu0 0.0
    %1413 = vmatprep.subr.mxu0 0.0
    %1414 = vmatpush1.msra.mxu0 0.0
    %1415 = vmatprep.subr.mxu0 0.0
    %1416 = vmatpush1.msra.mxu0 0.0
    %1417 = vmatprep.subr.mxu0 0.0
    %1418 = vmatpush1.msra.mxu0 0.0
    %1419 = vmatprep.subr.mxu0 0.0
    %1420 = vmatpush1.msra.mxu0 0.0
    %1421 = vmatprep.subr.mxu0 0.0
    %1422 = vmatpush1.msra.mxu0 0.0
    %1423 = vmatprep.subr.mxu0 0.0
    %1424 = vmatpush1.msra.mxu0 0.0
    %1425 = vmatprep.subr.mxu0 0.0
    %1426 = vmatpush1.msra.mxu0 0.0
    %1427 = vmatprep.subr.mxu0 0.0
    %1428 = vmatpush1.msra.mxu0 0.0
    %1429 = vmatprep.subr.mxu0 0.0
    %1430 = vmatpush1.msra.mxu0 0.0
    %1431 = vmatprep.subr.mxu0 0.0
    %1432 = vmatpush1.msra.mxu0 0.0
    %1433 = vmatprep.subr.mxu0 0.0
    %1434 = vmatpush1.msra.mxu0 0.0
    %1435 = vmatprep.subr.mxu0 0.0
    %1436 = vmatpush1.msra.mxu0 0.0
    %1437 = vmatprep.subr.mxu0 0.0
    %1438 = vmatpush1.msra.mxu0 0.0
    %1439 = vmatprep.subr.mxu0 0.0
    %1440 = vmatpush1.msra.mxu0 0.0
    %1441 = vmatprep.subr.mxu0 0.0
    %1442 = vmatpush1.msra.mxu0 0.0
    %1443 = vmatprep.subr.mxu0 0.0
    %1444 = vmatpush1.msra.mxu0 0.0
    %1445 = vmatprep.subr.mxu0 0.0
    %1446 = vmatpush1.msra.mxu0 0.0
    %1447 = vmatprep.subr.mxu0 0.0
    %1448 = vmatpush1.msra.mxu0 0.0
    %1449 = vmatprep.mubr.f32.mxu0 0.0
    %1450 = vmatmul.mubr.f32.gmra.mrb[0].mxu0 %v359
    %v1451 = vpop.f32.mrb[0].mxu0
    %v1452 = vadd.f32 0.0, %v1451
    %v1453 = vpop.f32.mrb[0].mxu0
    %1454 = vmatprep.mubr.f32.mxu0 0.0
    %1455 = vmatmul.mubr.f32.gmra.mrb[0].mxu0 %v362
    %v1456 = vpop.f32.mrb[0].mxu0
    %v1457 = vadd.f32 0.0, %v1456
    %v1458 = vpop.f32.mrb[0].mxu0
    %1459 = vmatprep.mubr.f32.mxu0 0.0
    %1460 = vmatmul.mubr.f32.gmra.mrb[0].mxu0 %v365
    %v1461 = vpop.f32.mrb[0].mxu0
    %v1462 = vadd.f32 0.0, %v1461
    %v1463 = vpop.f32.mrb[0].mxu0
    %1464 = vmatprep.mubr.f32.mxu0 0.0
    %1465 = vmatmul.mubr.f32.gmra.mrb[0].mxu0 %v368
    %v1466 = vpop.f32.mrb[0].mxu0
    %v1467 = vadd.f32 0.0, %v1466
    %v1468 = vpop.f32.mrb[0].mxu0
    %1469 = vmatprep.mubr.f32.mxu0 0.0
    %1470 = vmatmul.mubr.f32.gmra.mrb[0].mxu0 %v371
    %v1471 = vpop.f32.mrb[0].mxu0
    %v1472 = vadd.f32 0.0, %v1471
    %v1473 = vpop.f32.mrb[0].mxu0
    %1474 = vmatprep.mubr.f32.mxu0 0.0
    %1475 = vmatmul.mubr.f32.gmra.mrb[0].mxu0 %v374
    %v1476 = vpop.f32.mrb[0].mxu0
    %v1477 = vadd.f32 0.0, %v1476
    %v1478 = vpop.f32.mrb[0].mxu0
    %1479 = vmatprep.mubr.f32.mxu0 0.0
    %1480 = vmatmul.mubr.f32.gmra.mrb[0].mxu0 %v377
    %v1481 = vpop.f32.mrb[0].mxu0
    %v1482 = vadd.f32 0.0, %v1481
    %v1483 = vpop.f32.mrb[0].mxu0
    %1484 = vmatprep.mubr.f32.mxu0 0.0
    %1485 = vmatmul.mubr.f32.gmra.mrb[0].mxu0 %v380
    %v1486 = vpop.f32.mrb[0].mxu0
    %v1487 = vadd.f32 0.0, %v1486
    %v1488 = vpop.f32.mrb[0].mxu0
    %1489 = vdwg.mxu0
    %v1490 = vmul.f32 %v1452, %v156
    %v1491 = vmul.f32 %v1457, %v157
    %v1492 = vmul.f32 %v1462, %v158
    %v1493 = vmul.f32 %v1467, %v159
    %v1494 = vmul.f32 %v1472, %v160
    %v1495 = vmul.f32 %v1477, %v161
    %v1496 = vmul.f32 %v1482, %v162
    %v1497 = vmul.f32 %v1487, %v163
    %1498 = vmatprep.subr.mxu0 0.0
    %1499 = vmatpush1.xpose.msra.mxu0 %v729
    %1500 = vmatprep.subr.mxu0 0.0
    %1501 = vmatpush1.xpose.msra.mxu0 %v733
    %1502 = vmatprep.subr.mxu0 0.0
    %1503 = vmatpush1.xpose.msra.mxu0 0.0
    %1504 = vmatprep.subr.mxu0 0.0
    %1505 = vmatpush1.xpose.msra.mxu0 0.0
    %1506 = vmatprep.subr.mxu0 0.0
    %1507 = vmatpush1.xpose.msra.mxu0 0.0
    %1508 = vmatprep.subr.mxu0 0.0
    %1509 = vmatpush1.xpose.msra.mxu0 0.0
    %1510 = vmatprep.subr.mxu0 0.0
    %1511 = vmatpush1.xpose.msra.mxu0 0.0
    %1512 = vmatprep.subr.mxu0 0.0
    %1513 = vmatpush1.xpose.msra.mxu0 0.0
    %1514 = vmatprep.subr.mxu0 0.0
    %1515 = vmatpush1.xpose.msra.mxu0 0.0
    %1516 = vmatprep.subr.mxu0 0.0
    %1517 = vmatpush1.xpose.msra.mxu0 0.0
    %1518 = vmatprep.subr.mxu0 0.0
    %1519 = vmatpush1.xpose.msra.mxu0 0.0
    %1520 = vmatprep.subr.mxu0 0.0
    %1521 = vmatpush1.xpose.msra.mxu0 0.0
    %1522 = vmatprep.subr.mxu0 0.0
    %1523 = vmatpush1.xpose.msra.mxu0 0.0
    %1524 = vmatprep.subr.mxu0 0.0
    %1525 = vmatpush1.xpose.msra.mxu0 0.0
    %1526 = vmatprep.subr.mxu0 0.0
    %1527 = vmatpush1.xpose.msra.mxu0 0.0
    %1528 = vmatprep.subr.mxu0 0.0
    %1529 = vmatpush1.xpose.msra.mxu0 0.0
    %1530 = vmatprep.subr.mxu0 0.0
    %1531 = vmatpush1.xpose.msra.mxu0 0.0
    %1532 = vmatprep.subr.mxu0 0.0
    %1533 = vmatpush1.xpose.msra.mxu0 0.0
    %1534 = vmatprep.subr.mxu0 0.0
    %1535 = vmatpush1.xpose.msra.mxu0 0.0
    %1536 = vmatprep.subr.mxu0 0.0
    %1537 = vmatpush1.xpose.msra.mxu0 0.0
    %1538 = vmatprep.subr.mxu0 0.0
    %1539 = vmatpush1.xpose.msra.mxu0 0.0
    %1540 = vmatprep.subr.mxu0 0.0
    %1541 = vmatpush1.xpose.msra.mxu0 0.0
    %1542 = vmatprep.subr.mxu0 0.0
    %1543 = vmatpush1.xpose.msra.mxu0 0.0
    %1544 = vmatprep.subr.mxu0 0.0
    %1545 = vmatpush1.xpose.msra.mxu0 0.0
    %1546 = vmatprep.subr.mxu0 0.0
    %1547 = vmatpush1.xpose.msra.mxu0 0.0
    %1548 = vmatprep.subr.mxu0 0.0
    %1549 = vmatpush1.xpose.msra.mxu0 0.0
    %1550 = vmatprep.subr.mxu0 0.0
    %1551 = vmatpush1.xpose.msra.mxu0 0.0
    %1552 = vmatprep.subr.mxu0 0.0
    %1553 = vmatpush1.xpose.msra.mxu0 0.0
    %1554 = vmatprep.subr.mxu0 0.0
    %1555 = vmatpush1.xpose.msra.mxu0 0.0
    %1556 = vmatprep.subr.mxu0 0.0
    %1557 = vmatpush1.xpose.msra.mxu0 0.0
    %1558 = vmatprep.subr.mxu0 0.0
    %1559 = vmatpush1.xpose.msra.mxu0 0.0
    %1560 = vmatprep.subr.mxu0 0.0
    %1561 = vmatpush1.xpose.msra.mxu0 0.0
    %1562 = vmatprep.mubr.f32.mxu0 0.0
    %1563 = vmatmul.mubr.f32.gmra.mrb[0].mxu0 %v1490
    %v1564 = vpop.f32.mrb[0].mxu0
    %v1565 = vadd.f32 0.0, %v1564
    %v1566 = vpop.f32.mrb[0].mxu0
    %1567 = vmatprep.mubr.f32.mxu0 0.0
    %1568 = vmatmul.mubr.f32.gmra.mrb[0].mxu0 %v1491
    %v1569 = vpop.f32.mrb[0].mxu0
    %v1570 = vadd.f32 0.0, %v1569
    %v1571 = vpop.f32.mrb[0].mxu0
    %1572 = vmatprep.mubr.f32.mxu0 0.0
    %1573 = vmatmul.mubr.f32.gmra.mrb[0].mxu0 %v1492
    %v1574 = vpop.f32.mrb[0].mxu0
    %v1575 = vadd.f32 0.0, %v1574
    %v1576 = vpop.f32.mrb[0].mxu0
    %1577 = vmatprep.mubr.f32.mxu0 0.0
    %1578 = vmatmul.mubr.f32.gmra.mrb[0].mxu0 %v1493
    %v1579 = vpop.f32.mrb[0].mxu0
    %v1580 = vadd.f32 0.0, %v1579
    %v1581 = vpop.f32.mrb[0].mxu0
    %1582 = vmatprep.mubr.f32.mxu0 0.0
    %1583 = vmatmul.mubr.f32.gmra.mrb[0].mxu0 %v1494
    %v1584 = vpop.f32.mrb[0].mxu0
    %v1585 = vadd.f32 0.0, %v1584
    %v1586 = vpop.f32.mrb[0].mxu0
    %1587 = vmatprep.mubr.f32.mxu0 0.0
    %1588 = vmatmul.mubr.f32.gmra.mrb[0].mxu0 %v1495
    %v1589 = vpop.f32.mrb[0].mxu0
    %v1590 = vadd.f32 0.0, %v1589
    %v1591 = vpop.f32.mrb[0].mxu0
    %1592 = vmatprep.mubr.f32.mxu0 0.0
    %1593 = vmatmul.mubr.f32.gmra.mrb[0].mxu0 %v1496
    %v1594 = vpop.f32.mrb[0].mxu0
    %v1595 = vadd.f32 0.0, %v1594
    %v1596 = vpop.f32.mrb[0].mxu0
    %1597 = vmatprep.mubr.f32.mxu0 0.0
    %1598 = vmatmul.mubr.f32.gmra.mrb[0].mxu0 %v1497
    %v1599 = vpop.f32.mrb[0].mxu0
    %v1600 = vadd.f32 0.0, %v1599
    %v1601 = vpop.f32.mrb[0].mxu0
    %1602 = vdwg.mxu0
    %v1603 = vmul.f32 %v1565, %v1370
    %v1604 = vmul.f32 %v1570, %v1372
    %v1605 = vmul.f32 %v1575, %v1374
    %v1606 = vmul.f32 %v1580, %v1376
    %v1607 = vmul.f32 %v1585, %v1378
    %v1608 = vmul.f32 %v1590, %v1380
    %v1609 = vmul.f32 %v1595, %v1382
    %v1610 = vmul.f32 %v1600, %v1384
    %v1611 = vsel %vm357, %v1603, 0.0
    %1612 = vadd.xlane.f32.xlu0 %v1611
    %v1613 = vpop.xlane.xlu0 %1612
    %v1614 = vsel %vm357, %v1604, 0.0
    %1615 = vadd.xlane.f32.xlu0 %v1614
    %v1616 = vpop.xlane.xlu0 %1615
    %v1617 = vsel %vm357, %v1605, 0.0
    %1618 = vadd.xlane.f32.xlu0 %v1617
    %v1619 = vpop.xlane.xlu0 %1618
    %v1620 = vsel %vm357, %v1606, 0.0
    %1621 = vadd.xlane.f32.xlu0 %v1620
    %v1622 = vpop.xlane.xlu0 %1621
    %v1623 = vsel %vm357, %v1607, 0.0
    %1624 = vadd.xlane.f32.xlu0 %v1623
    %v1625 = vpop.xlane.xlu0 %1624
    %v1626 = vsel %vm357, %v1608, 0.0
    %1627 = vadd.xlane.f32.xlu0 %v1626
    %v1628 = vpop.xlane.xlu0 %1627
    %v1629 = vsel %vm357, %v1609, 0.0
    %1630 = vadd.xlane.f32.xlu0 %v1629
    %v1631 = vpop.xlane.xlu0 %1630
    %v1632 = vsel %vm357, %v1610, 0.0
    %1633 = vadd.xlane.f32.xlu0 %v1632
    %v1634 = vpop.xlane.xlu0 %1633
    %v1635 = vand.u32 2147483647, %v1613
    %v1636 = vand.u32 2147483647, %v1616
    %v1637 = vand.u32 2147483647, %v1619
    %v1638 = vand.u32 2147483647, %v1622
    %v1639 = vand.u32 2147483647, %v1625
    %v1640 = vand.u32 2147483647, %v1628
    %v1641 = vand.u32 2147483647, %v1631
    %v1642 = vand.u32 2147483647, %v1634
    %v1643 = vsub.f32 0.0, %v1339
    %v1644 = vsub.f32 0.0, %v1342
    %v1645 = vsub.f32 0.0, %v1345
    %v1646 = vsub.f32 0.0, %v1348
    %v1647 = vsub.f32 0.0, %v1351
    %v1648 = vsub.f32 0.0, %v1354
    %v1649 = vsub.f32 0.0, %v1357
    %v1650 = vsub.f32 0.0, %v1360
    %v1651 = vmul.f32 %v1643, 1.442695
    %v1652 = vpow.pop %v1651
    %v1653 = vmul.f32 %v1644, 1.442695
    %v1654 = vpow.pop %v1653
    %v1655 = vmul.f32 %v1645, 1.442695
    %v1656 = vpow.pop %v1655
    %v1657 = vmul.f32 %v1646, 1.442695
    %v1658 = vpow.pop %v1657
    %v1659 = vmul.f32 %v1647, 1.442695
    %v1660 = vpow.pop %v1659
    %v1661 = vmul.f32 %v1648, 1.442695
    %v1662 = vpow.pop %v1661
    %v1663 = vmul.f32 %v1649, 1.442695
    %v1664 = vpow.pop %v1663
    %v1665 = vmul.f32 %v1650, 1.442695
    %v1666 = vpow.pop %v1665
    %v1667 = vmax.f32 %v1635, %v1652
    %v1668 = vmax.f32 %v1636, %v1654
    %v1669 = vmax.f32 %v1637, %v1656
    %v1670 = vmax.f32 %v1638, %v1658
    %v1671 = vmax.f32 %v1639, %v1660
    %v1672 = vmax.f32 %v1640, %v1662
    %v1673 = vmax.f32 %v1641, %v1664
    %v1674 = vmax.f32 %v1642, %v1666
    %v1675 = vadd.f32 %v1667, 1e-06
    %v1676 = vadd.f32 %v1668, 1e-06
    %v1677 = vadd.f32 %v1669, 1e-06
    %v1678 = vadd.f32 %v1670, 1e-06
    %v1679 = vadd.f32 %v1671, 1e-06
    %v1680 = vadd.f32 %v1672, 1e-06
    %v1681 = vadd.f32 %v1673, 1e-06
    %v1682 = vadd.f32 %v1674, 1e-06
    %v1683 = vrcp.pop %v1675
    %v1684 = vrcp.pop %v1676
    %v1685 = vrcp.pop %v1677
    %v1686 = vrcp.pop %v1678
    %v1687 = vrcp.pop %v1679
    %v1688 = vrcp.pop %v1680
    %v1689 = vrcp.pop %v1681
    %v1690 = vrcp.pop %v1682
    %v1691 = vmul.f32 %v1603, %v1683
    %v1692 = vmul.f32 %v1604, %v1684
    %v1693 = vmul.f32 %v1605, %v1685
    %v1694 = vmul.f32 %v1606, %v1686
    %v1695 = vmul.f32 %v1607, %v1687
    %v1696 = vmul.f32 %v1608, %v1688
    %v1697 = vmul.f32 %v1609, %v1689
    %v1698 = vmul.f32 %v1610, %v1690
    %v1700 = vsel %vm357, %v1691, 0
    %v1703 = vsel %vm357, %v1692, 0
    %v1706 = vsel %vm357, %v1693, 0
    %v1709 = vsel %vm357, %v1694, 0
    %v1712 = vsel %vm357, %v1695, 0
    %v1715 = vsel %vm357, %v1696, 0
    %v1718 = vsel %vm357, %v1697, 0
    %v1721 = vsel %vm357, %v1698, 0
    %1723 = vmatprep.subr.mxu0 0.0
    %1724 = vmatpush1.msra.mxu0 %v351
    %1725 = vmatprep.subr.mxu0 0.0
    %1726 = vmatpush1.msra.mxu0 %v354
    %1727 = vmatprep.subr.mxu0 0.0
    %1728 = vmatpush1.msra.mxu0 0.0
    %1729 = vmatprep.subr.mxu0 0.0
    %1730 = vmatpush1.msra.mxu0 0.0
    %1731 = vmatprep.subr.mxu0 0.0
    %1732 = vmatpush1.msra.mxu0 0.0
    %1733 = vmatprep.subr.mxu0 0.0
    %1734 = vmatpush1.msra.mxu0 0.0
    %1735 = vmatprep.subr.mxu0 0.0
    %1736 = vmatpush1.msra.mxu0 0.0
    %1737 = vmatprep.subr.mxu0 0.0
    %1738 = vmatpush1.msra.mxu0 0.0
    %1739 = vmatprep.subr.mxu0 0.0
    %1740 = vmatpush1.msra.mxu0 0.0
    %1741 = vmatprep.subr.mxu0 0.0
    %1742 = vmatpush1.msra.mxu0 0.0
    %1743 = vmatprep.subr.mxu0 0.0
    %1744 = vmatpush1.msra.mxu0 0.0
    %1745 = vmatprep.subr.mxu0 0.0
    %1746 = vmatpush1.msra.mxu0 0.0
    %1747 = vmatprep.subr.mxu0 0.0
    %1748 = vmatpush1.msra.mxu0 0.0
    %1749 = vmatprep.subr.mxu0 0.0
    %1750 = vmatpush1.msra.mxu0 0.0
    %1751 = vmatprep.subr.mxu0 0.0
    %1752 = vmatpush1.msra.mxu0 0.0
    %1753 = vmatprep.subr.mxu0 0.0
    %1754 = vmatpush1.msra.mxu0 0.0
    %1755 = vmatprep.subr.mxu0 0.0
    %1756 = vmatpush1.msra.mxu0 0.0
    %1757 = vmatprep.subr.mxu0 0.0
    %1758 = vmatpush1.msra.mxu0 0.0
    %1759 = vmatprep.subr.mxu0 0.0
    %1760 = vmatpush1.msra.mxu0 0.0
    %1761 = vmatprep.subr.mxu0 0.0
    %1762 = vmatpush1.msra.mxu0 0.0
    %1763 = vmatprep.subr.mxu0 0.0
    %1764 = vmatpush1.msra.mxu0 0.0
    %1765 = vmatprep.subr.mxu0 0.0
    %1766 = vmatpush1.msra.mxu0 0.0
    %1767 = vmatprep.subr.mxu0 0.0
    %1768 = vmatpush1.msra.mxu0 0.0
    %1769 = vmatprep.subr.mxu0 0.0
    %1770 = vmatpush1.msra.mxu0 0.0
    %1771 = vmatprep.subr.mxu0 0.0
    %1772 = vmatpush1.msra.mxu0 0.0
    %1773 = vmatprep.subr.mxu0 0.0
    %1774 = vmatpush1.msra.mxu0 0.0
    %1775 = vmatprep.subr.mxu0 0.0
    %1776 = vmatpush1.msra.mxu0 0.0
    %1777 = vmatprep.subr.mxu0 0.0
    %1778 = vmatpush1.msra.mxu0 0.0
    %1779 = vmatprep.subr.mxu0 0.0
    %1780 = vmatpush1.msra.mxu0 0.0
    %1781 = vmatprep.subr.mxu0 0.0
    %1782 = vmatpush1.msra.mxu0 0.0
    %1783 = vmatprep.subr.mxu0 0.0
    %1784 = vmatpush1.msra.mxu0 0.0
    %1785 = vmatprep.subr.mxu0 0.0
    %1786 = vmatpush1.msra.mxu0 0.0
    %1787 = vmatprep.mubr.f32.mxu0 0.0
    %1788 = vmatmul.mubr.f32.gmra.mrb[0].mxu0 %v1700
    %v1789 = vpop.f32.mrb[0].mxu0
    %v1790 = vadd.f32 0.0, %v1789
    %v1791 = vpop.f32.mrb[0].mxu0
    %1792 = vmatprep.mubr.f32.mxu0 0.0
    %1793 = vmatmul.mubr.f32.gmra.mrb[0].mxu0 %v1703
    %v1794 = vpop.f32.mrb[0].mxu0
    %v1795 = vadd.f32 0.0, %v1794
    %v1796 = vpop.f32.mrb[0].mxu0
    %1797 = vmatprep.mubr.f32.mxu0 0.0
    %1798 = vmatmul.mubr.f32.gmra.mrb[0].mxu0 %v1706
    %v1799 = vpop.f32.mrb[0].mxu0
    %v1800 = vadd.f32 0.0, %v1799
    %v1801 = vpop.f32.mrb[0].mxu0
    %1802 = vmatprep.mubr.f32.mxu0 0.0
    %1803 = vmatmul.mubr.f32.gmra.mrb[0].mxu0 %v1709
    %v1804 = vpop.f32.mrb[0].mxu0
    %v1805 = vadd.f32 0.0, %v1804
    %v1806 = vpop.f32.mrb[0].mxu0
    %1807 = vmatprep.mubr.f32.mxu0 0.0
    %1808 = vmatmul.mubr.f32.gmra.mrb[0].mxu0 %v1712
    %v1809 = vpop.f32.mrb[0].mxu0
    %v1810 = vadd.f32 0.0, %v1809
    %v1811 = vpop.f32.mrb[0].mxu0
    %1812 = vmatprep.mubr.f32.mxu0 0.0
    %1813 = vmatmul.mubr.f32.gmra.mrb[0].mxu0 %v1715
    %v1814 = vpop.f32.mrb[0].mxu0
    %v1815 = vadd.f32 0.0, %v1814
    %v1816 = vpop.f32.mrb[0].mxu0
    %1817 = vmatprep.mubr.f32.mxu0 0.0
    %1818 = vmatmul.mubr.f32.gmra.mrb[0].mxu0 %v1718
    %v1819 = vpop.f32.mrb[0].mxu0
    %v1820 = vadd.f32 0.0, %v1819
    %v1821 = vpop.f32.mrb[0].mxu0
    %1822 = vmatprep.mubr.f32.mxu0 0.0
    %1823 = vmatmul.mubr.f32.gmra.mrb[0].mxu0 %v1721
    %v1824 = vpop.f32.mrb[0].mxu0
    %v1825 = vadd.f32 0.0, %v1824
    %v1826 = vpop.f32.mrb[0].mxu0
    %1827 = vdwg.mxu0
    %v1828 = vmul.f32 %v1790, %v164
    %v1829 = vmul.f32 %v1795, %v165
    %v1830 = vmul.f32 %v1800, %v166
    %v1831 = vmul.f32 %v1805, %v167
    %v1832 = vmul.f32 %v1810, %v168
    %v1833 = vmul.f32 %v1815, %v169
    %v1834 = vmul.f32 %v1820, %v170
    %v1835 = vmul.f32 %v1825, %v171
    %v1837 = vsel %vm499, %v174, 0
    %v1840 = vsel %vm499, %v175, 0
    %1842 = vmatprep.subr.mxu0 0.0
    %1843 = vmatpush1.msra.mxu0 %v1828
    %1844 = vmatprep.subr.mxu0 0.0
    %1845 = vmatpush1.msra.mxu0 %v1829
    %1846 = vmatprep.subr.mxu0 0.0
    %1847 = vmatpush1.msra.mxu0 %v1830
    %1848 = vmatprep.subr.mxu0 0.0
    %1849 = vmatpush1.msra.mxu0 %v1831
    %1850 = vmatprep.subr.mxu0 0.0
    %1851 = vmatpush1.msra.mxu0 %v1832
    %1852 = vmatprep.subr.mxu0 0.0
    %1853 = vmatpush1.msra.mxu0 %v1833
    %1854 = vmatprep.subr.mxu0 0.0
    %1855 = vmatpush1.msra.mxu0 %v1834
    %1856 = vmatprep.subr.mxu0 0.0
    %1857 = vmatpush1.msra.mxu0 %v1835
    %1858 = vmatprep.subr.mxu0 0.0
    %1859 = vmatpush1.msra.mxu0 0.0
    %1860 = vmatprep.subr.mxu0 0.0
    %1861 = vmatpush1.msra.mxu0 0.0
    %1862 = vmatprep.subr.mxu0 0.0
    %1863 = vmatpush1.msra.mxu0 0.0
    %1864 = vmatprep.subr.mxu0 0.0
    %1865 = vmatpush1.msra.mxu0 0.0
    %1866 = vmatprep.subr.mxu0 0.0
    %1867 = vmatpush1.msra.mxu0 0.0
    %1868 = vmatprep.subr.mxu0 0.0
    %1869 = vmatpush1.msra.mxu0 0.0
    %1870 = vmatprep.subr.mxu0 0.0
    %1871 = vmatpush1.msra.mxu0 0.0
    %1872 = vmatprep.subr.mxu0 0.0
    %1873 = vmatpush1.msra.mxu0 0.0
    %1874 = vmatprep.subr.mxu0 0.0
    %1875 = vmatpush1.msra.mxu0 0.0
    %1876 = vmatprep.subr.mxu0 0.0
    %1877 = vmatpush1.msra.mxu0 0.0
    %1878 = vmatprep.subr.mxu0 0.0
    %1879 = vmatpush1.msra.mxu0 0.0
    %1880 = vmatprep.subr.mxu0 0.0
    %1881 = vmatpush1.msra.mxu0 0.0
    %1882 = vmatprep.subr.mxu0 0.0
    %1883 = vmatpush1.msra.mxu0 0.0
    %1884 = vmatprep.subr.mxu0 0.0
    %1885 = vmatpush1.msra.mxu0 0.0
    %1886 = vmatprep.subr.mxu0 0.0
    %1887 = vmatpush1.msra.mxu0 0.0
    %1888 = vmatprep.subr.mxu0 0.0
    %1889 = vmatpush1.msra.mxu0 0.0
    %1890 = vmatprep.subr.mxu0 0.0
    %1891 = vmatpush1.msra.mxu0 0.0
    %1892 = vmatprep.subr.mxu0 0.0
    %1893 = vmatpush1.msra.mxu0 0.0
    %1894 = vmatprep.subr.mxu0 0.0
    %1895 = vmatpush1.msra.mxu0 0.0
    %1896 = vmatprep.subr.mxu0 0.0
    %1897 = vmatpush1.msra.mxu0 0.0
    %1898 = vmatprep.subr.mxu0 0.0
    %1899 = vmatpush1.msra.mxu0 0.0
    %1900 = vmatprep.subr.mxu0 0.0
    %1901 = vmatpush1.msra.mxu0 0.0
    %1902 = vmatprep.subr.mxu0 0.0
    %1903 = vmatpush1.msra.mxu0 0.0
    %1904 = vmatprep.subr.mxu0 0.0
    %1905 = vmatpush1.msra.mxu0 0.0
    %1906 = vmatprep.mubr.f32.mxu0 0.0
    %1907 = vmatmul.mubr.f32.gmra.mrb[0].mxu0 %v1837
    %v1908 = vpop.f32.mrb[0].mxu0
    %v1909 = vadd.f32 0.0, %v1908
    %v1910 = vpop.f32.mrb[0].mxu0
    %1911 = vmatprep.mubr.f32.mxu0 0.0
    %1912 = vmatmul.mubr.f32.gmra.mrb[0].mxu0 %v1840
    %v1913 = vpop.f32.mrb[0].mxu0
    %v1914 = vadd.f32 0.0, %v1913
    %v1915 = vpop.f32.mrb[0].mxu0
    %1916 = vdwg.mxu0
    %1917 = vmatprep.subr.mxu0 0.0
    %1918 = vmatpush1.msra.mxu0 %v178
    %1919 = vmatprep.subr.mxu0 0.0
    %1920 = vmatpush1.msra.mxu0 %v179
    %1921 = vmatprep.subr.mxu0 0.0
    %1922 = vmatpush1.msra.mxu0 %v180
    %1923 = vmatprep.subr.mxu0 0.0
    %1924 = vmatpush1.msra.mxu0 %v181
    %1925 = vmatprep.subr.mxu0 0.0
    %1926 = vmatpush1.msra.mxu0 %v182
    %1927 = vmatprep.subr.mxu0 0.0
    %1928 = vmatpush1.msra.mxu0 %v183
    %1929 = vmatprep.subr.mxu0 0.0
    %1930 = vmatpush1.msra.mxu0 %v184
    %1931 = vmatprep.subr.mxu0 0.0
    %1932 = vmatpush1.msra.mxu0 %v185
    %1933 = vmatprep.subr.mxu0 0.0
    %1934 = vmatpush1.msra.mxu0 %v186
    %1935 = vmatprep.subr.mxu0 0.0
    %1936 = vmatpush1.msra.mxu0 %v187
    %1937 = vmatprep.subr.mxu0 0.0
    %1938 = vmatpush1.msra.mxu0 %v188
    %1939 = vmatprep.subr.mxu0 0.0
    %1940 = vmatpush1.msra.mxu0 %v189
    %1941 = vmatprep.subr.mxu0 0.0
    %1942 = vmatpush1.msra.mxu0 %v190
    %1943 = vmatprep.subr.mxu0 0.0
    %1944 = vmatpush1.msra.mxu0 %v191
    %1945 = vmatprep.subr.mxu0 0.0
    %1946 = vmatpush1.msra.mxu0 %v192
    %1947 = vmatprep.subr.mxu0 0.0
    %1948 = vmatpush1.msra.mxu0 %v193
    %1949 = vmatprep.subr.mxu0 0.0
    %1950 = vmatpush1.msra.mxu0 0.0
    %1951 = vmatprep.subr.mxu0 0.0
    %1952 = vmatpush1.msra.mxu0 0.0
    %1953 = vmatprep.subr.mxu0 0.0
    %1954 = vmatpush1.msra.mxu0 0.0
    %1955 = vmatprep.subr.mxu0 0.0
    %1956 = vmatpush1.msra.mxu0 0.0
    %1957 = vmatprep.subr.mxu0 0.0
    %1958 = vmatpush1.msra.mxu0 0.0
    %1959 = vmatprep.subr.mxu0 0.0
    %1960 = vmatpush1.msra.mxu0 0.0
    %1961 = vmatprep.subr.mxu0 0.0
    %1962 = vmatpush1.msra.mxu0 0.0
    %1963 = vmatprep.subr.mxu0 0.0
    %1964 = vmatpush1.msra.mxu0 0.0
    %1965 = vmatprep.subr.mxu0 0.0
    %1966 = vmatpush1.msra.mxu0 0.0
    %1967 = vmatprep.subr.mxu0 0.0
    %1968 = vmatpush1.msra.mxu0 0.0
    %1969 = vmatprep.subr.mxu0 0.0
    %1970 = vmatpush1.msra.mxu0 0.0
    %1971 = vmatprep.subr.mxu0 0.0
    %1972 = vmatpush1.msra.mxu0 0.0
    %1973 = vmatprep.subr.mxu0 0.0
    %1974 = vmatpush1.msra.mxu0 0.0
    %1975 = vmatprep.subr.mxu0 0.0
    %1976 = vmatpush1.msra.mxu0 0.0
    %1977 = vmatprep.subr.mxu0 0.0
    %1978 = vmatpush1.msra.mxu0 0.0
    %1979 = vmatprep.subr.mxu0 0.0
    %1980 = vmatpush1.msra.mxu0 0.0
    %1981 = vmatprep.mubr.f32.mxu0 0.0
    %1982 = vmatmul.mubr.f32.gmra.mrb[0].mxu0 %v1909
    %v1983 = vpop.f32.mrb[0].mxu0
    %v1984 = vadd.f32 0.0, %v1983
    %v1985 = vpop.f32.mrb[0].mxu0
    %1986 = vmatprep.mubr.f32.mxu0 0.0
    %1987 = vmatmul.mubr.f32.gmra.mrb[0].mxu0 %v1914
    %v1988 = vpop.f32.mrb[0].mxu0
    %v1989 = vadd.f32 0.0, %v1988
    %v1990 = vpop.f32.mrb[0].mxu0
    %1991 = vdwg.mxu0
    %v1992 = vsub.f32 %v1909, %v1984
    %v1993 = vsub.f32 %v1914, %v1989
    %v1994 = vmul.f32 %v1992, %v1992
    %v1995 = vmul.f32 %v1993, %v1993
    %1996 = vmatprep.subr.mxu0 0.0
    %1997 = vmatpush1.msra.mxu0 %v178
    %1998 = vmatprep.subr.mxu0 0.0
    %1999 = vmatpush1.msra.mxu0 %v179
    %2000 = vmatprep.subr.mxu0 0.0
    %2001 = vmatpush1.msra.mxu0 %v180
    %2002 = vmatprep.subr.mxu0 0.0
    %2003 = vmatpush1.msra.mxu0 %v181
    %2004 = vmatprep.subr.mxu0 0.0
    %2005 = vmatpush1.msra.mxu0 %v182
    %2006 = vmatprep.subr.mxu0 0.0
    %2007 = vmatpush1.msra.mxu0 %v183
    %2008 = vmatprep.subr.mxu0 0.0
    %2009 = vmatpush1.msra.mxu0 %v184
    %2010 = vmatprep.subr.mxu0 0.0
    %2011 = vmatpush1.msra.mxu0 %v185
    %2012 = vmatprep.subr.mxu0 0.0
    %2013 = vmatpush1.msra.mxu0 %v186
    %2014 = vmatprep.subr.mxu0 0.0
    %2015 = vmatpush1.msra.mxu0 %v187
    %2016 = vmatprep.subr.mxu0 0.0
    %2017 = vmatpush1.msra.mxu0 %v188
    %2018 = vmatprep.subr.mxu0 0.0
    %2019 = vmatpush1.msra.mxu0 %v189
    %2020 = vmatprep.subr.mxu0 0.0
    %2021 = vmatpush1.msra.mxu0 %v190
    %2022 = vmatprep.subr.mxu0 0.0
    %2023 = vmatpush1.msra.mxu0 %v191
    %2024 = vmatprep.subr.mxu0 0.0
    %2025 = vmatpush1.msra.mxu0 %v192
    %2026 = vmatprep.subr.mxu0 0.0
    %2027 = vmatpush1.msra.mxu0 %v193
    %2028 = vmatprep.subr.mxu0 0.0
    %2029 = vmatpush1.msra.mxu0 0.0
    %2030 = vmatprep.subr.mxu0 0.0
    %2031 = vmatpush1.msra.mxu0 0.0
    %2032 = vmatprep.subr.mxu0 0.0
    %2033 = vmatpush1.msra.mxu0 0.0
    %2034 = vmatprep.subr.mxu0 0.0
    %2035 = vmatpush1.msra.mxu0 0.0
    %2036 = vmatprep.subr.mxu0 0.0
    %2037 = vmatpush1.msra.mxu0 0.0
    %2038 = vmatprep.subr.mxu0 0.0
    %2039 = vmatpush1.msra.mxu0 0.0
    %2040 = vmatprep.subr.mxu0 0.0
    %2041 = vmatpush1.msra.mxu0 0.0
    %2042 = vmatprep.subr.mxu0 0.0
    %2043 = vmatpush1.msra.mxu0 0.0
    %2044 = vmatprep.subr.mxu0 0.0
    %2045 = vmatpush1.msra.mxu0 0.0
    %2046 = vmatprep.subr.mxu0 0.0
    %2047 = vmatpush1.msra.mxu0 0.0
    %2048 = vmatprep.subr.mxu0 0.0
    %2049 = vmatpush1.msra.mxu0 0.0
    %2050 = vmatprep.subr.mxu0 0.0
    %2051 = vmatpush1.msra.mxu0 0.0
    %2052 = vmatprep.subr.mxu0 0.0
    %2053 = vmatpush1.msra.mxu0 0.0
    %2054 = vmatprep.subr.mxu0 0.0
    %2055 = vmatpush1.msra.mxu0 0.0
    %2056 = vmatprep.subr.mxu0 0.0
    %2057 = vmatpush1.msra.mxu0 0.0
    %2058 = vmatprep.subr.mxu0 0.0
    %2059 = vmatpush1.msra.mxu0 0.0
    %2060 = vmatprep.mubr.f32.mxu0 0.0
    %2061 = vmatmul.mubr.f32.gmra.mrb[0].mxu0 %v1994
    %v2062 = vpop.f32.mrb[0].mxu0
    %v2063 = vadd.f32 1e-05, %v2062
    %v2064 = vpop.f32.mrb[0].mxu0
    %2065 = vmatprep.mubr.f32.mxu0 0.0
    %2066 = vmatmul.mubr.f32.gmra.mrb[0].mxu0 %v1995
    %v2067 = vpop.f32.mrb[0].mxu0
    %v2068 = vadd.f32 1e-05, %v2067
    %v2069 = vpop.f32.mrb[0].mxu0
    %2070 = vdwg.mxu0
    %v2071 = vrsqrt.pop %v2063
    %v2072 = vrsqrt.pop %v2068
    %v2073 = vmul.f32 %v1992, %v2071
    %v2074 = vmul.f32 %v1993, %v2072
    %v2075 = vadd.f32 %v121, 1.0
    %v2076 = vlaneseq
    %v2077 = vshrl.u32 %v2076, 7
    %v2078 = vsub.s32 0, %v2077
    %v2079 = vrot.slane %v2075, %v2078
    %v2080 = vmul.f32 %v2073, %v2079
    %v2081 = vmul.f32 %v2074, %v2079
    %v2082 = vsub.f32 0.0, %v310
    %v2083 = vsub.f32 0.0, %v314
    %v2084 = vmul.f32 %v2082, 1.442695
    %v2085 = vpow.pop %v2084
    %v2086 = vmul.f32 %v2083, 1.442695
    %v2087 = vpow.pop %v2086
    %v2088 = vadd.f32 %v2085, 1.0
    %v2089 = vadd.f32 %v2087, 1.0
    %v2090 = vrcp.pop %v2088
    %v2091 = vmul.f32 1.0, %v2090
    %v2092 = vrcp.pop %v2089
    %v2093 = vmul.f32 1.0, %v2092
    %v2094 = vmul.f32 %v310, %v2091
    %v2095 = vmul.f32 %v314, %v2093
    %v2096 = vlaneseq
    %v2097 = vshrl.u32 %v2096, 7
    %v2098 = vsub.s32 0, %v2097
    %v2099 = vrot.slane %v122, %v2098
    %v2100 = vmul.f32 %v2099, %v593
    %v2101 = vmul.f32 %v2099, %v594
    %v2102 = vadd.f32 %v2080, %v2100
    %v2103 = vadd.f32 %v2081, %v2101
    %v2104 = vmul.f32 %v2102, %v2094
    %v2105 = vmul.f32 %v2103, %v2095
    %v2106 = vpack.c.bf16 %v2105, %v2104
    %v2107 = vld [vmem:[%s6] sm:$0xf]
    %v2108 = vld [vmem:[%s6 + $0x4] sm:$0xf]
    %v2109 = vld [vmem:[%s6 + $0x8] sm:$0xf]
    %v2110 = vld [vmem:[%s6 + $0xc] sm:$0xf]
    %v2111 = vld [vmem:[%s6 + $0x10] sm:$0xf]
    %v2112 = vld [vmem:[%s6 + $0x14] sm:$0xf]
    %v2113 = vld [vmem:[%s6 + $0x18] sm:$0xf]
    %v2114 = vld [vmem:[%s6 + $0x1c] sm:$0xf]
    %v2115 = vld [vmem:[%s6 + $0x20] sm:$0xf]
    %v2116 = vld [vmem:[%s6 + $0x24] sm:$0xf]
    %v2117 = vld [vmem:[%s6 + $0x28] sm:$0xf]
    %v2118 = vld [vmem:[%s6 + $0x2c] sm:$0xf]
    %v2119 = vld [vmem:[%s6 + $0x30] sm:$0xf]
    %v2120 = vld [vmem:[%s6 + $0x34] sm:$0xf]
    %v2121 = vld [vmem:[%s6 + $0x38] sm:$0xf]
    %v2122 = vld [vmem:[%s6 + $0x3c] sm:$0xf]
    %v2139 = vunpack.c.l.b16 %v2107
    %v2140 = vunpack.c.l.b16 %v2108
    %v2141 = vunpack.c.l.b16 %v2109
    %v2142 = vunpack.c.l.b16 %v2110
    %v2143 = vunpack.c.l.b16 %v2111
    %v2144 = vunpack.c.l.b16 %v2112
    %v2145 = vunpack.c.l.b16 %v2113
    %v2146 = vunpack.c.l.b16 %v2114
    %v2147 = vunpack.c.l.b16 %v2115
    %v2148 = vunpack.c.l.b16 %v2116
    %v2149 = vunpack.c.l.b16 %v2117
    %v2150 = vunpack.c.l.b16 %v2118
    %v2151 = vunpack.c.l.b16 %v2119
    %v2152 = vunpack.c.l.b16 %v2120
    %v2153 = vunpack.c.l.b16 %v2121
    %v2154 = vunpack.c.l.b16 %v2122
    %v2155 = vpack.c.b16 %v2140, %v2139
    %v2156 = vpack.c.b16 %v2142, %v2141
    %v2157 = vpack.c.b16 %v2144, %v2143
    %v2158 = vpack.c.b16 %v2146, %v2145
    %v2159 = vpack.c.b16 %v2148, %v2147
    %v2160 = vpack.c.b16 %v2150, %v2149
    %v2161 = vpack.c.b16 %v2152, %v2151
    %v2162 = vpack.c.b16 %v2154, %v2153
    %2171 = vmatprep.subr.bf16.mxu0 0
    %2172 = vmatpush1.bf16.msra.mxu0 %v2155
    %2173 = vmatprep.subr.bf16.mxu0 0
    %2174 = vmatpush1.bf16.msra.mxu0 %v2156
    %2175 = vmatprep.subr.bf16.mxu0 0
    %2176 = vmatpush1.bf16.msra.mxu0 %v2157
    %2177 = vmatprep.subr.bf16.mxu0 0
    %2178 = vmatpush1.bf16.msra.mxu0 %v2158
    %2179 = vmatprep.subr.bf16.mxu0 0
    %2180 = vmatpush1.bf16.msra.mxu0 %v2159
    %2181 = vmatprep.subr.bf16.mxu0 0
    %2182 = vmatpush1.bf16.msra.mxu0 %v2160
    %2183 = vmatprep.subr.bf16.mxu0 0
    %2184 = vmatpush1.bf16.msra.mxu0 %v2161
    %2185 = vmatprep.subr.bf16.mxu0 0
    %2186 = vmatpush1.bf16.msra.mxu0 %v2162
    %2187 = vmatprep.subr.bf16.mxu0 0
    %2188 = vmatpush1.bf16.msra.mxu0 0
    %2189 = vmatprep.subr.bf16.mxu0 0
    %2190 = vmatpush1.bf16.msra.mxu0 0
    %2191 = vmatprep.subr.bf16.mxu0 0
    %2192 = vmatpush1.bf16.msra.mxu0 0
    %2193 = vmatprep.subr.bf16.mxu0 0
    %2194 = vmatpush1.bf16.msra.mxu0 0
    %2195 = vmatprep.subr.bf16.mxu0 0
    %2196 = vmatpush1.bf16.msra.mxu0 0
    %2197 = vmatprep.subr.bf16.mxu0 0
    %2198 = vmatpush1.bf16.msra.mxu0 0
    %2199 = vmatprep.subr.bf16.mxu0 0
    %2200 = vmatpush1.bf16.msra.mxu0 0
    %2201 = vmatprep.subr.bf16.mxu0 0
    %2202 = vmatpush1.bf16.msra.mxu0 0
    %2203 = vmatprep.mubr.bf16.mxu0 0
    %2204 = vmatmul.mubr.bf16.gmra.mrb[0].mxu0 %v2106
    %v2205 = vpop.f32.mrb[0].mxu0
    %v2206 = vadd.f32 0.0, %v2205
    %v2207 = vpop.f32.mrb[0].mxu0
    %v2208 = vpop.f32.mrb[0].mxu0
    %v2209 = vadd.f32 0.0, %v2208
    %v2210 = vpop.f32.mrb[0].mxu0
    %2211 = vdwg.mxu0
    %v2212 = vadd.f32 %v118, %v2206
    %v2213 = vadd.f32 %v119, %v2209
    %2214 = vst.msk [vmem:[#allocation13] sm:$0xff] %vm194, %v2212
    %2215 = vst.msk [vmem:[#allocation13 + $0x8] sm:$0xff] %vm194, %v2213
    // Predicated region
    $region70: #{tpu_custom_call.1} parent=1 // pred_check
      _
    $region71: #{tpu_custom_call.1} parent=1 // pred_check_branch
      %2217 = sbr.rel (0) target = $region73
    $region72: #{tpu_custom_call.1} parent=1 // pred_region
      %s2219 = ssub.s32 256, 256
      %2220 = vsyncadd [#allocation4], %s2219
      %s2221 = sshll.u32 [#allocation13], 4
      %s2222 = int_to_ptr.vmem [resolvable:$true] %s2221
      %2227 = dma.vmem_to_hbm [thread:$0]  %s2222, 256, %s11, [#allocation4], 128, 128, 8
    $region73: #{tpu_custom_call.1} parent=1 // pred_fallthru
      _
    // Predicated region
    $region74: #{tpu_custom_call.1} parent=1 // pred_check
      _
    $region75: #{tpu_custom_call.1} parent=1 // pred_check_branch
      %2229 = sbr.rel (0) target = $region77
    $region76: #{tpu_custom_call.1} parent=1 // pred_region
      %2230 = dma.done [#allocation4], 256
    $region77: #{tpu_custom_call.1} parent=1 // pred_fallthru
      _
    %2231 = vsyncpa [#allocation3], 1
    %2232 = vsyncpa [#allocation6], 1
    %2233 = vsyncpa [#allocation9], 1
    %2234 = vsyncpa [#allocation12], 1
    %2235 = vsyncpa [#allocation4], 1

</llo_original>
